<compile_context>
chip_gen: v5e
topology: v5e:2x2
jax: 0.10.0
libtpu: 0.0.40
codegen_flags: <defaults>
</compile_context>

<pallas_src>
import jax
import jax.numpy as jnp
from jax.experimental import pallas as pl
from jax.experimental.pallas import tpu as pltpu


def _round_up(x, m):
    return (x + m - 1) // m * m


def _vmem_capacity_bytes():
    try:
        return int(pltpu.get_tpu_info().vmem_capacity_bytes)
    except Exception:
        return 64 << 20  # conservative fallback (v7x per-TensorCore)


def _per_row_bytes(Kp, Hp, H4p):
    # Rough per-batch-row VMEM bytes: double-buffered streamed input/output
    # tiles plus live f32 + bf16 intermediates for the two hidden activations.
    return (2 * (2 * Kp) * 2          # bf16 input tile, 2 pipeline buffers
            + 2 * (2 * Hp) * 4        # f32 output tile, 2 pipeline buffers
            + (2 * Hp) * (4 + 2)      # layer-1 activation (f32 + bf16 copy)
            + (2 * H4p) * (4 + 2))    # layer-2 activation (f32 + bf16 copy)


def _pick_tm(B, block_m, per_row, weight_bytes, vmem_budget):
    avail = max(vmem_budget - weight_bytes, 2 << 20)
    tm = min(block_m, max(16, (avail // per_row) // 16 * 16))
    tm = min(tm, _round_up(B, 16))
    if B >= 32:
        # Prefer >= 2 grid steps so the "parallel" batch axis spans both
        # TensorCores on v7x (2 TC/chip); no-op for tiny batches.
        tm = min(tm, _round_up(pl.cdiv(B, 2), 16))
    return max(tm, 16)


def _mlp_cond_kernel(x_ref, w1_ref, b1_ref, w2_ref, b2_ref, w3_ref, b3_ref, o_ref):
    def silu(v):
        # x * sigmoid(x); transcendental goes to the EUP slot, kept in f32.
        return v * jax.nn.sigmoid(v)

    # Layer 1: [tm, 2Kp] @ [2Kp, 2Hp] -> [real | imag] already in block layout.
    h = jnp.dot(x_ref[...], w1_ref[...],
                preferred_element_type=jnp.float32) + b1_ref[...]
    h = silu(h).astype(jnp.bfloat16)
    # Layer 2: [tm, 2Hp] @ [2Hp, 2H4p]
    h = jnp.dot(h, w2_ref[...],
                preferred_element_type=jnp.float32) + b2_ref[...]
    h = silu(h).astype(jnp.bfloat16)
    # Layer 3: [tm, 2H4p] @ [2H4p, 2Hp]
    h = jnp.dot(h, w3_ref[...],
                preferred_element_type=jnp.float32) + b3_ref[...]
    o_ref[...] = h.astype(o_ref.dtype)


def prepare_params(params, dtype=jnp.bfloat16):
    """Build block-complex weights/biases ONCE (hoisted out of the call path).

    params: dict with weights in [in, out] layout (transposed vs torch):
      w1r, w1i: [cond_dim, H]    b1r, b1i: [H]
      w2r, w2i: [H, 4H]          b2r, b2i: [4H]
      w3r, w3i: [4H, H]          b3r, b3i: [H]
    """
    cond_dim, H = params["w1r"].shape
    H4 = params["w2r"].shape[1]
    Kp, Hp, H4p = _round_up(cond_dim, 128), _round_up(H, 128), _round_up(H4, 128)

    def blk_w(wr, wi, kp, np_):
        wr = jnp.pad(wr, ((0, kp - wr.shape[0]), (0, np_ - wr.shape[1])))
        wi = jnp.pad(wi, ((0, kp - wi.shape[0]), (0, np_ - wi.shape[1])))
        top = jnp.concatenate([wr, wi], axis=1)     # [Kp, 2Np]
        bot = jnp.concatenate([-wi, wr], axis=1)    # [Kp, 2Np]
        return jnp.concatenate([top, bot], axis=0).astype(dtype)  # [2Kp, 2Np]

    def blk_b(br, bi, np_):
        # out.real += (br - bi), out.imag += (br + bi)
        br = jnp.pad(br, (0, np_ - br.shape[0]))
        bi = jnp.pad(bi, (0, np_ - bi.shape[0]))
        return jnp.concatenate([br - bi, br + bi]).reshape(1, 2 * np_).astype(jnp.float32)

    return {
        "w1": blk_w(params["w1r"], params["w1i"], Kp, Hp),
        "b1": blk_b(params["b1r"], params["b1i"], Hp),
        "w2": blk_w(params["w2r"], params["w2i"], Hp, H4p),
        "b2": blk_b(params["b2r"], params["b2i"], H4p),
        "w3": blk_w(params["w3r"], params["w3i"], H4p, Hp),
        "b3": blk_b(params["b3r"], params["b3i"], Hp),
        "dims": (cond_dim, H, H4, Kp, Hp, H4p),
    }


def mlp_condition_embedding(c_real, c_imag, prepared, *, block_m=256):
    """Fused complex MLP condition embedding. Returns (out_real, out_imag) f32 [B, H]."""
    cond_dim, H, H4, Kp, Hp, H4p = prepared["dims"]
    B = c_real.shape[0]
    f32, bf16 = jnp.float32, jnp.bfloat16

    weight_bytes = sum(int(prepared[k].size) * prepared[k].dtype.itemsize
                       for k in ("w1", "b1", "w2", "b2", "w3", "b3"))
    per_row = _per_row_bytes(Kp, Hp, H4p)

    vmem_cap = _vmem_capacity_bytes()
    vmem_budget = max(vmem_cap - (8 << 20), 16 << 20)
    # TODO(synk): for very large H the resident block weights alone can exceed
    # VMEM; that regime would need a K/N-tiled grid instead of resident weights.

    tm = _pick_tm(B, block_m, per_row, weight_bytes, vmem_budget)
    Bp = _round_up(B, tm)
    grid = (Bp // tm,)

    vmem_limit = int(min(max(weight_bytes + per_row * tm + (2 << 20), 16 << 20),
                         vmem_budget))

    # Activations: bf16, block layout [xr | xi], lane-dense padded.
    def pad_act(x):
        x = x.astype(bf16)
        return jnp.pad(x, ((0, Bp - B), (0, Kp - cond_dim)))

    x_blk = jnp.concatenate([pad_act(c_real), pad_act(c_imag)], axis=1)  # [Bp, 2Kp]

    x_spec = pl.BlockSpec((tm, 2 * Kp), lambda i: (i, 0))
    out_spec = pl.BlockSpec((tm, 2 * Hp), lambda i: (i, 0))

    def resident(shape):
        # Constant block index + single-buffered: fetched once, stays in VMEM,
        # no wasted double-buffer (critical on v7x's 64 MiB VMEM).
        return pl.BlockSpec(shape, lambda i: (0, 0),
                            pipeline_mode=pl.Buffered(buffer_count=1))

    in_specs = [
        x_spec,
        resident((2 * Kp, 2 * Hp)), resident((1, 2 * Hp)),
        resident((2 * Hp, 2 * H4p)), resident((1, 2 * H4p)),
        resident((2 * H4p, 2 * Hp)), resident((1, 2 * Hp)),
    ]

    flops = 2 * Bp * ((2 * Kp) * (2 * Hp) + (2 * Hp) * (2 * H4p) + (2 * H4p) * (2 * Hp))
    cost = pl.CostEstimate(
        flops=flops,
        transcendentals=2 * Bp * (Hp + H4p),
        bytes_accessed=weight_bytes + 2 * Bp * 2 * Kp + 4 * Bp * 2 * Hp,
    )

    out = pl.pallas_call(
        _mlp_cond_kernel,
        out_shape=jax.ShapeDtypeStruct((Bp, 2 * Hp), f32),
        grid_spec=pltpu.PrefetchScalarGridSpec(
            num_scalar_prefetch=0,
            grid=grid,
            in_specs=in_specs,
            out_specs=out_spec,
        ),
        compiler_params=pltpu.CompilerParams(
            dimension_semantics=("parallel",),   # batch tiles split across TCs on v7x
            vmem_limit_bytes=vmem_limit,
        ),
        cost_estimate=cost,
    )(x_blk, prepared["w1"], prepared["b1"], prepared["w2"], prepared["b2"],
      prepared["w3"], prepared["b3"])

    return out[:B, :H], out[:B, Hp:Hp + H]


def _reference(c_real, c_imag, params):
    """Pure-JAX f32 reference matching the PyTorch module."""
    hi_p = jax.lax.Precision.HIGHEST

    def clinear(xr, xi, wr, wi, br, bi):
        yr = (jnp.dot(xr, wr, precision=hi_p) + br) - (jnp.dot(xi, wi, precision=hi_p) + bi)
        yi = (jnp.dot(xi, wr, precision=hi_p) + br) + (jnp.dot(xr, wi, precision=hi_p) + bi)
        return yr, yi

    def silu(v):
        return v * jax.nn.sigmoid(v)

    hr, hi = clinear(c_real, c_imag, params["w1r"], params["w1i"],
                     params["b1r"], params["b1i"])
    hr, hi = silu(hr), silu(hi)
    hr, hi = clinear(hr, hi, params["w2r"], params["w2i"],
                     params["b2r"], params["b2i"])
    hr, hi = silu(hr), silu(hi)
    hr, hi = clinear(hr, hi, params["w3r"], params["w3i"],
                     params["b3r"], params["b3i"])
    return hr, hi


if __name__ == "__main__":
    key = jax.random.PRNGKey(0)
    B, cond_dim, hidden = 16, 64, 128   # small shapes; cond_dim=64 exercises lane padding
    keys = jax.random.split(key, 14)

    def w(k, shape):
        # init_weight_norm: weights ~ N(0, 0.02). Biases are 0 at init, but we use
        # small nonzero biases here to exercise the (br - bi)/(br + bi) combination.
        return 0.02 * jax.random.normal(k, shape, dtype=jnp.float32)

    params = {
        "w1r": w(keys[0], (cond_dim, hidden)),
        "w1i": w(keys[1], (cond_dim, hidden)),
        "b1r": w(keys[2], (hidden,)),
        "b1i": w(keys[3], (hidden,)),
        "w2r": w(keys[4], (hidden, 4 * hidden)),
        "w2i": w(keys[5], (hidden, 4 * hidden)),
        "b2r": w(keys[6], (4 * hidden,)),
        "b2i": w(keys[7], (4 * hidden,)),
        "w3r": w(keys[8], (4 * hidden, hidden)),
        "w3i": w(keys[9], (4 * hidden, hidden)),
        "b3r": w(keys[10], (hidden,)),
        "b3i": w(keys[11], (hidden,)),
    }
    c_real = jax.random.normal(keys[12], (B, cond_dim), dtype=jnp.float32)
    c_imag = jax.random.normal(keys[13], (B, cond_dim), dtype=jnp.float32)

    prepared = prepare_params(params)            # one-time block-weight build
    jax.block_until_ready(prepared["w2"])

    out_r, out_i = mlp_condition_embedding(c_real, c_imag, prepared)
    jax.block_until_ready((out_r, out_i))

    ref_r, ref_i = _reference(c_real, c_imag, params)
    assert out_r.shape == (B, hidden) and out_i.shape == (B, hidden)
    err = max(float(jnp.max(jnp.abs(out_r - ref_r))),
              float(jnp.max(jnp.abs(out_i - ref_i))))
    # bf16 MXU inputs with f32 accumulation -> loose but meaningful tolerance.
    assert err < 5e-3, f"max abs error too large: {err}"
    print("KERNEL_OK")
</pallas_src>

<mosaic_0001>
module attributes {stable_mosaic.version = 11 : i64} {
  func.func @_mlp_cond_kernel(%arg0: i32, %arg1: memref<16x256xbf16, #tpu.memory_space<vmem>>, %arg2: memref<256x256xbf16, #tpu.memory_space<vmem>>, %arg3: memref<1x256xf32, #tpu.memory_space<vmem>>, %arg4: memref<256x1024xbf16, #tpu.memory_space<vmem>>, %arg5: memref<1x1024xf32, #tpu.memory_space<vmem>>, %arg6: memref<1024x256xbf16, #tpu.memory_space<vmem>>, %arg7: memref<1x256xf32, #tpu.memory_space<vmem>>, %arg8: memref<16x256xf32, #tpu.memory_space<vmem>>) attributes {dimension_semantics = [#tpu.dimension_semantics<parallel>], iteration_bounds = array<i64: 1>, scalar_prefetch = 0 : i64, scratch_operands = 0 : i64, tpu.core_type = #tpu.core_type<tc>, window_params = [{transform_indices = @transform_0, window_bounds = array<i64: 16, 256>}, {pipeline_mode = #tpu.pipeline_mode<synchronous>, transform_indices = @transform_1, window_bounds = array<i64: 256, 256>}, {pipeline_mode = #tpu.pipeline_mode<synchronous>, transform_indices = @transform_2, window_bounds = array<i64: 1, 256>}, {pipeline_mode = #tpu.pipeline_mode<synchronous>, transform_indices = @transform_3, window_bounds = array<i64: 256, 1024>}, {pipeline_mode = #tpu.pipeline_mode<synchronous>, transform_indices = @transform_4, window_bounds = array<i64: 1, 1024>}, {pipeline_mode = #tpu.pipeline_mode<synchronous>, transform_indices = @transform_5, window_bounds = array<i64: 1024, 256>}, {pipeline_mode = #tpu.pipeline_mode<synchronous>, transform_indices = @transform_6, window_bounds = array<i64: 1, 256>}, {transform_indices = @transform_7, window_bounds = array<i64: 16, 256>}]} {
    %c0 = arith.constant 0 : index
    %c0_0 = arith.constant 0 : index
    %0 = vector.load %arg1[%c0, %c0_0] : memref<16x256xbf16, #tpu.memory_space<vmem>>, vector<16x256xbf16>
    %c0_1 = arith.constant 0 : index
    %c0_2 = arith.constant 0 : index
    %1 = vector.load %arg2[%c0_1, %c0_2] : memref<256x256xbf16, #tpu.memory_space<vmem>>, vector<256x256xbf16>
    %cst = arith.constant dense<0.000000e+00> : vector<16x256xf32>
    %2 = tpu.matmul %0, %1, %cst {dimension_numbers = #tpu.dot_dimension_numbers<[1], [0], [0], [1], [0, 0, 1, 1], [], []>} : vector<16x256xbf16>, vector<256x256xbf16>, vector<16x256xf32> -> vector<16x256xf32>
    %c0_3 = arith.constant 0 : index
    %c0_4 = arith.constant 0 : index
    %3 = vector.load %arg3[%c0_3, %c0_4] : memref<1x256xf32, #tpu.memory_space<vmem>>, vector<1x256xf32>
    %4 = vector.broadcast %3 : vector<1x256xf32> to vector<16x256xf32>
    %5 = arith.addf %2, %4 : vector<16x256xf32>
    %6 = arith.negf %5 : vector<16x256xf32>
    %7 = math.exp %6 : vector<16x256xf32>
    %cst_5 = arith.constant 1.000000e+00 : f32
    %8 = vector.broadcast %cst_5 : f32 to vector<16x256xf32>
    %9 = arith.addf %8, %7 : vector<16x256xf32>
    %10 = arith.divf %8, %9 : vector<16x256xf32>
    %11 = arith.mulf %5, %10 : vector<16x256xf32>
    %12 = arith.truncf %11 : vector<16x256xf32> to vector<16x256xbf16>
    %c0_6 = arith.constant 0 : index
    %c0_7 = arith.constant 0 : index
    %13 = vector.load %arg4[%c0_6, %c0_7] : memref<256x1024xbf16, #tpu.memory_space<vmem>>, vector<256x1024xbf16>
    %cst_8 = arith.constant dense<0.000000e+00> : vector<16x1024xf32>
    %14 = tpu.matmul %12, %13, %cst_8 {dimension_numbers = #tpu.dot_dimension_numbers<[1], [0], [0], [1], [0, 0, 1, 1], [], []>} : vector<16x256xbf16>, vector<256x1024xbf16>, vector<16x1024xf32> -> vector<16x1024xf32>
    %c0_9 = arith.constant 0 : index
    %c0_10 = arith.constant 0 : index
    %15 = vector.load %arg5[%c0_9, %c0_10] : memref<1x1024xf32, #tpu.memory_space<vmem>>, vector<1x1024xf32>
    %16 = vector.broadcast %15 : vector<1x1024xf32> to vector<16x1024xf32>
    %17 = arith.addf %14, %16 : vector<16x1024xf32>
    %18 = arith.negf %17 : vector<16x1024xf32>
    %19 = math.exp %18 : vector<16x1024xf32>
    %cst_11 = arith.constant 1.000000e+00 : f32
    %20 = vector.broadcast %cst_11 : f32 to vector<16x1024xf32>
    %21 = arith.addf %20, %19 : vector<16x1024xf32>
    %22 = arith.divf %20, %21 : vector<16x1024xf32>
    %23 = arith.mulf %17, %22 : vector<16x1024xf32>
    %24 = arith.truncf %23 : vector<16x1024xf32> to vector<16x1024xbf16>
    %c0_12 = arith.constant 0 : index
    %c0_13 = arith.constant 0 : index
    %25 = vector.load %arg6[%c0_12, %c0_13] : memref<1024x256xbf16, #tpu.memory_space<vmem>>, vector<1024x256xbf16>
    %cst_14 = arith.constant dense<0.000000e+00> : vector<16x256xf32>
    %26 = tpu.matmul %24, %25, %cst_14 {dimension_numbers = #tpu.dot_dimension_numbers<[1], [0], [0], [1], [0, 0, 1, 1], [], []>} : vector<16x1024xbf16>, vector<1024x256xbf16>, vector<16x256xf32> -> vector<16x256xf32>
    %c0_15 = arith.constant 0 : index
    %c0_16 = arith.constant 0 : index
    %27 = vector.load %arg7[%c0_15, %c0_16] : memref<1x256xf32, #tpu.memory_space<vmem>>, vector<1x256xf32>
    %28 = vector.broadcast %27 : vector<1x256xf32> to vector<16x256xf32>
    %29 = arith.addf %26, %28 : vector<16x256xf32>
    %c0_17 = arith.constant 0 : index
    %c0_18 = arith.constant 0 : index
    %30 = vector.load %arg8[%c0_17, %c0_18] : memref<16x256xf32, #tpu.memory_space<vmem>>, vector<16x256xf32>
    tpu.vector_store %arg8[%c0_17, %c0_18], %29 {strides = array<i32>} : memref<16x256xf32, #tpu.memory_space<vmem>>, vector<16x256xf32>,
    return
  }
  func.func @transform_0(%arg0: i32) -> (i32, i32) {
    %c0_i32 = arith.constant 0 : i32
    %c0_i32_0 = arith.constant 0 : i32
    return %arg0, %c0_i32 : i32, i32
  }
  func.func @transform_1(%arg0: i32) -> (i32, i32) {
    %c0_i32 = arith.constant 0 : i32
    %c0_i32_0 = arith.constant 0 : i32
    %c0_i32_1 = arith.constant 0 : i32
    return %c0_i32, %c0_i32_0 : i32, i32
  }
  func.func @transform_2(%arg0: i32) -> (i32, i32) {
    %c0_i32 = arith.constant 0 : i32
    %c0_i32_0 = arith.constant 0 : i32
    %c0_i32_1 = arith.constant 0 : i32
    return %c0_i32, %c0_i32_0 : i32, i32
  }
  func.func @transform_3(%arg0: i32) -> (i32, i32) {
    %c0_i32 = arith.constant 0 : i32
    %c0_i32_0 = arith.constant 0 : i32
    %c0_i32_1 = arith.constant 0 : i32
    return %c0_i32, %c0_i32_0 : i32, i32
  }
  func.func @transform_4(%arg0: i32) -> (i32, i32) {
    %c0_i32 = arith.constant 0 : i32
    %c0_i32_0 = arith.constant 0 : i32
    %c0_i32_1 = arith.constant 0 : i32
    return %c0_i32, %c0_i32_0 : i32, i32
  }
  func.func @transform_5(%arg0: i32) -> (i32, i32) {
    %c0_i32 = arith.constant 0 : i32
    %c0_i32_0 = arith.constant 0 : i32
    %c0_i32_1 = arith.constant 0 : i32
    return %c0_i32, %c0_i32_0 : i32, i32
  }
  func.func @transform_6(%arg0: i32) -> (i32, i32) {
    %c0_i32 = arith.constant 0 : i32
    %c0_i32_0 = arith.constant 0 : i32
    %c0_i32_1 = arith.constant 0 : i32
    return %c0_i32, %c0_i32_0 : i32, i32
  }
  func.func @transform_7(%arg0: i32) -> (i32, i32) {
    %c0_i32 = arith.constant 0 : i32
    %c0_i32_0 = arith.constant 0 : i32
    return %arg0, %c0_i32 : i32, i32
  }
}

</mosaic_0001>

<llo_original>
// kernel: tpu_custom_call.1
$region0: #{tpu_custom_call.1}
  #allocation0 [shape = 'u32[]', space=smem, size = 0x4, offset = 0x4, fixed_abs, tag = 'smem constant byte address 0x4 - core index']
  #allocation1 [shape = 'u32[72,128]{1,0:T(1,128)}', space=vmem, size = 0x9000, scoped, tag = 'internal scratch']
  %s0 = inlined_call_operand.hbm [shape: bf16[16,256], index: 0, kind: input, shape index: {}]
  %s1 = inlined_call_operand.hbm [shape: bf16[256,256], index: 1, kind: input, shape index: {}]
  %s2 = inlined_call_operand.hbm [shape: f32[1,256], index: 2, kind: input, shape index: {}]
  %s3 = inlined_call_operand.hbm [shape: bf16[256,1024], index: 3, kind: input, shape index: {}]
  %s4 = inlined_call_operand.hbm [shape: f32[1,1024], index: 4, kind: input, shape index: {}]
  %s5 = inlined_call_operand.hbm [shape: bf16[1024,256], index: 5, kind: input, shape index: {}]
  %s6 = inlined_call_operand.vmem [shape: f32[1,256], index: 6, kind: input, shape index: {}]
  %s7 = inlined_call_operand.hbm [shape: f32[16,256], index: 7, kind: output, shape index: {}]
  %s8 = sld [smem:[#allocation0]]
  $region62: #{tpu_custom_call.1} parent=0
    _
  %s10 = ssub.s32 1, %s8
  %s11 = scalar_select 0, %s10, %s8
  $region1: #{tpu_custom_call.1} parent=0
    #allocation2 [shape = 'u8[8192]{0}', space=vmem, size = 0x2000, scoped, tag = 'input window, operand 0, single buffered']
    #allocation3 [shape = 's32[1]{0}', space=sflag, size = 0x4, scoped, tag = 'scoped memory for tpu_custom_call.1']
    #allocation4 [shape = 's32[1]{0}', space=sflag, size = 0x4, scoped, tag = 'scoped memory for tpu_custom_call.1']
    #allocation5 [shape = 'u8[131072]{0}', space=vmem, size = 0x20000, scoped, tag = 'input window, operand 1, single buffered']
    #allocation6 [shape = 's32[1]{0}', space=sflag, size = 0x4, scoped, tag = 'scoped memory for tpu_custom_call.1']
    #allocation7 [shape = 'u8[1024]{0}', space=vmem, size = 0x400, scoped, tag = 'input window, operand 2, single buffered']
    #allocation8 [shape = 'u8[524288]{0}', space=vmem, size = 0x80000, scoped, tag = 'input window, operand 3, single buffered']
    #allocation9 [shape = 's32[1]{0}', space=sflag, size = 0x4, scoped, tag = 'scoped memory for tpu_custom_call.1']
    #allocation10 [shape = 'u8[4096]{0}', space=vmem, size = 0x1000, scoped, tag = 'input window, operand 4, single buffered']
    #allocation11 [shape = 'u8[524288]{0}', space=vmem, size = 0x80000, scoped, tag = 'input window, operand 5, single buffered']
    #allocation12 [shape = 's32[1]{0}', space=sflag, size = 0x4, scoped, tag = 'scoped memory for tpu_custom_call.1']
    #allocation13 [shape = 'u8[16384]{0}', space=vmem, size = 0x4000, scoped, tag = 'output window, operand 0, single buffered']
    %12 = vsyncpa [#allocation3], 0
    %13 = vsyncpa [#allocation6], 0
    %14 = vsyncpa [#allocation9], 0
    %15 = vsyncpa [#allocation12], 0
    %16 = vsyncpa [#allocation4], 0
    // Predicated region
    $region2: #{tpu_custom_call.1} parent=1 // pred_check
      _
    $region3: #{tpu_custom_call.1} parent=1 // pred_check_branch
      %18 = sbr.rel (0) target = $region5
    $region4: #{tpu_custom_call.1} parent=1 // pred_region
      %20 = vsyncadd [#allocation3], 0
      %s21 = sshll.u32 %s0, 4
      %s22 = int_to_ptr.hbm [resolvable:$true] %s21
      %s23 = sshll.u32 [#allocation2], 4
      %s24 = int_to_ptr.vmem [resolvable:$true] %s23
      %29 = dma.hbm_to_vmem [thread:$0]  %s22, 256, %s24, [#allocation3], 128, 128, 8
    $region5: #{tpu_custom_call.1} parent=1 // pred_fallthru
      _
    // Predicated region
    $region6: #{tpu_custom_call.1} parent=1 // pred_check
      _
    $region7: #{tpu_custom_call.1} parent=1 // pred_check_branch
      %31 = sbr.rel (0) target = $region9
    $region8: #{tpu_custom_call.1} parent=1 // pred_region
      %33 = vsyncadd [#allocation6], 0
      %s34 = sshll.u32 %s1, 4
      %s35 = int_to_ptr.hbm [resolvable:$true] %s34
      %s36 = sshll.u32 [#allocation5], 4
      %s37 = int_to_ptr.vmem [resolvable:$true] %s36
      %42 = dma.hbm_to_vmem [thread:$0]  %s35, 4096, %s37, [#allocation6], 128, 128, 8
    $region9: #{tpu_custom_call.1} parent=1 // pred_fallthru
      _
    // Predicated region
    $region10: #{tpu_custom_call.1} parent=1 // pred_check
      _
    $region11: #{tpu_custom_call.1} parent=1 // pred_check_branch
      %44 = sbr.rel (0) target = $region13
    $region12: #{tpu_custom_call.1} parent=1 // pred_region
      %46 = vsyncadd [#allocation6], 0
      %s48 = sshll.u32 %s2, 4
      %s49 = int_to_ptr.hbm [resolvable:$true] %s48
      %s50 = sshll.u32 [#allocation7], 4
      %s51 = int_to_ptr.vmem [resolvable:$true] %s50
      %53 = dma.hbm_to_vmem [thread:$0]  %s49, 32, %s51, [#allocation6]
    $region13: #{tpu_custom_call.1} parent=1 // pred_fallthru
      _
    // Predicated region
    $region14: #{tpu_custom_call.1} parent=1 // pred_check
      _
    $region15: #{tpu_custom_call.1} parent=1 // pred_check_branch
      %55 = sbr.rel (0) target = $region17
    $region16: #{tpu_custom_call.1} parent=1 // pred_region
      %57 = vsyncadd [#allocation9], 0
      %s58 = sshll.u32 %s3, 4
      %s59 = int_to_ptr.hbm [resolvable:$true] %s58
      %s60 = sshll.u32 [#allocation8], 4
      %s61 = int_to_ptr.vmem [resolvable:$true] %s60
      %66 = dma.hbm_to_vmem [thread:$0]  %s59, 16384, %s61, [#allocation9], 512, 512, 32
    $region17: #{tpu_custom_call.1} parent=1 // pred_fallthru
      _
    // Predicated region
    $region18: #{tpu_custom_call.1} parent=1 // pred_check
      _
    $region19: #{tpu_custom_call.1} parent=1 // pred_check_branch
      %68 = sbr.rel (0) target = $region21
    $region20: #{tpu_custom_call.1} parent=1 // pred_region
      %70 = vsyncadd [#allocation9], 0
      %s72 = sshll.u32 %s4, 4
      %s73 = int_to_ptr.hbm [resolvable:$true] %s72
      %s74 = sshll.u32 [#allocation10], 4
      %s75 = int_to_ptr.vmem [resolvable:$true] %s74
      %77 = dma.hbm_to_vmem [thread:$0]  %s73, 128, %s75, [#allocation9]
    $region21: #{tpu_custom_call.1} parent=1 // pred_fallthru
      _
    // Predicated region
    $region22: #{tpu_custom_call.1} parent=1 // pred_check
      _
    $region23: #{tpu_custom_call.1} parent=1 // pred_check_branch
      %79 = sbr.rel (0) target = $region25
    $region24: #{tpu_custom_call.1} parent=1 // pred_region
      %81 = vsyncadd [#allocation12], 0
      %s82 = sshll.u32 %s5, 4
      %s83 = int_to_ptr.hbm [resolvable:$true] %s82
      %s84 = sshll.u32 [#allocation11], 4
      %s85 = int_to_ptr.vmem [resolvable:$true] %s84
      %90 = dma.hbm_to_vmem [thread:$0]  %s83, 16384, %s85, [#allocation12], 128, 128, 8
    $region25: #{tpu_custom_call.1} parent=1 // pred_fallthru
      _
    // Predicated region
    $region26: #{tpu_custom_call.1} parent=1 // pred_check
      _
    $region27: #{tpu_custom_call.1} parent=1 // pred_check_branch
      %92 = sbr.rel (0) target = $region29
    $region28: #{tpu_custom_call.1} parent=1 // pred_region
      _
    $region29: #{tpu_custom_call.1} parent=1 // pred_fallthru
      _
    // Predicated region
    $region30: #{tpu_custom_call.1} parent=1 // pred_check
      _
    $region31: #{tpu_custom_call.1} parent=1 // pred_check_branch
      %94 = sbr.rel (0) target = $region33
    $region32: #{tpu_custom_call.1} parent=1 // pred_region
      %96 = dma.done [#allocation3], 256
    $region33: #{tpu_custom_call.1} parent=1 // pred_fallthru
      _
    // Predicated region
    $region34: #{tpu_custom_call.1} parent=1 // pred_check
      _
    $region35: #{tpu_custom_call.1} parent=1 // pred_check_branch
      %98 = sbr.rel (0) target = $region37
    $region36: #{tpu_custom_call.1} parent=1 // pred_region
      %100 = dma.done [#allocation6], 4096
    $region37: #{tpu_custom_call.1} parent=1 // pred_fallthru
      _
    // Predicated region
    $region38: #{tpu_custom_call.1} parent=1 // pred_check
      _
    $region39: #{tpu_custom_call.1} parent=1 // pred_check_branch
      %102 = sbr.rel (0) target = $region41
    $region40: #{tpu_custom_call.1} parent=1 // pred_region
      %104 = dma.done [#allocation6], 32
    $region41: #{tpu_custom_call.1} parent=1 // pred_fallthru
      _
    // Predicated region
    $region42: #{tpu_custom_call.1} parent=1 // pred_check
      _
    $region43: #{tpu_custom_call.1} parent=1 // pred_check_branch
      %106 = sbr.rel (0) target = $region45
    $region44: #{tpu_custom_call.1} parent=1 // pred_region
      %108 = dma.done [#allocation9], 16384
    $region45: #{tpu_custom_call.1} parent=1 // pred_fallthru
      _
    // Predicated region
    $region46: #{tpu_custom_call.1} parent=1 // pred_check
      _
    $region47: #{tpu_custom_call.1} parent=1 // pred_check_branch
      %110 = sbr.rel (0) target = $region49
    $region48: #{tpu_custom_call.1} parent=1 // pred_region
      %112 = dma.done [#allocation9], 128
    $region49: #{tpu_custom_call.1} parent=1 // pred_fallthru
      _
    // Predicated region
    $region50: #{tpu_custom_call.1} parent=1 // pred_check
      _
    $region51: #{tpu_custom_call.1} parent=1 // pred_check_branch
      %114 = sbr.rel (0) target = $region53
    $region52: #{tpu_custom_call.1} parent=1 // pred_region
      %116 = dma.done [#allocation12], 16384
    $region53: #{tpu_custom_call.1} parent=1 // pred_fallthru
      _
    %v117 = vld [vmem:[#allocation2] sm:$0xff]
    %v118 = vld [vmem:[#allocation2 + $0x8] sm:$0xff]
    %v119 = vld [vmem:[#allocation5] sm:$0xff]
    %v120 = vld [vmem:[#allocation5 + $0x8] sm:$0xff]
    %v121 = vld [vmem:[#allocation5 + $0x10] sm:$0xff]
    %v122 = vld [vmem:[#allocation5 + $0x18] sm:$0xff]
    %v123 = vld [vmem:[#allocation5 + $0x20] sm:$0xff]
    %v124 = vld [vmem:[#allocation5 + $0x28] sm:$0xff]
    %v125 = vld [vmem:[#allocation5 + $0x30] sm:$0xff]
    %v126 = vld [vmem:[#allocation5 + $0x38] sm:$0xff]
    %v127 = vld [vmem:[#allocation5 + $0x40] sm:$0xff]
    %v128 = vld [vmem:[#allocation5 + $0x48] sm:$0xff]
    %v129 = vld [vmem:[#allocation5 + $0x50] sm:$0xff]
    %v130 = vld [vmem:[#allocation5 + $0x58] sm:$0xff]
    %v131 = vld [vmem:[#allocation5 + $0x60] sm:$0xff]
    %v132 = vld [vmem:[#allocation5 + $0x68] sm:$0xff]
    %v133 = vld [vmem:[#allocation5 + $0x70] sm:$0xff]
    %v134 = vld [vmem:[#allocation5 + $0x78] sm:$0xff]
    %v135 = vld [vmem:[#allocation5 + $0x80] sm:$0xff]
    %v136 = vld [vmem:[#allocation5 + $0x88] sm:$0xff]
    %v137 = vld [vmem:[#allocation5 + $0x90] sm:$0xff]
    %v138 = vld [vmem:[#allocation5 + $0x98] sm:$0xff]
    %v139 = vld [vmem:[#allocation5 + $0xa0] sm:$0xff]
    %v140 = vld [vmem:[#allocation5 + $0xa8] sm:$0xff]
    %v141 = vld [vmem:[#allocation5 + $0xb0] sm:$0xff]
    %v142 = vld [vmem:[#allocation5 + $0xb8] sm:$0xff]
    %v143 = vld [vmem:[#allocation5 + $0xc0] sm:$0xff]
    %v144 = vld [vmem:[#allocation5 + $0xc8] sm:$0xff]
    %v145 = vld [vmem:[#allocation5 + $0xd0] sm:$0xff]
    %v146 = vld [vmem:[#allocation5 + $0xd8] sm:$0xff]
    %v147 = vld [vmem:[#allocation5 + $0xe0] sm:$0xff]
    %v148 = vld [vmem:[#allocation5 + $0xe8] sm:$0xff]
    %v149 = vld [vmem:[#allocation5 + $0xf0] sm:$0xff]
    %v150 = vld [vmem:[#allocation5 + $0xf8] sm:$0xff]
    %v151 = vld [vmem:[#allocation7] sm:$0x3]
    %v153 = vperm.slane %v151, 0
    %v154 = vperm.slane %v151, 1
    %v159 = vunpack.c.l.b16 %v117
    %v160 = vunpack.c.h.b16 %v117
    %v161 = vunpack.c.l.b16 %v118
    %v162 = vunpack.c.h.b16 %v118
    %v163 = vpack.c.b16 %v161, %v159
    %v164 = vpack.c.b16 %v162, %v160
    %v199 = vunpack.c.l.b16 %v119
    %v200 = vunpack.c.h.b16 %v119
    %v201 = vunpack.c.l.b16 %v120
    %v202 = vunpack.c.h.b16 %v120
    %v203 = vunpack.c.l.b16 %v121
    %v204 = vunpack.c.h.b16 %v121
    %v205 = vunpack.c.l.b16 %v122
    %v206 = vunpack.c.h.b16 %v122
    %v207 = vunpack.c.l.b16 %v123
    %v208 = vunpack.c.h.b16 %v123
    %v209 = vunpack.c.l.b16 %v124
    %v210 = vunpack.c.h.b16 %v124
    %v211 = vunpack.c.l.b16 %v125
    %v212 = vunpack.c.h.b16 %v125
    %v213 = vunpack.c.l.b16 %v126
    %v214 = vunpack.c.h.b16 %v126
    %v215 = vunpack.c.l.b16 %v127
    %v216 = vunpack.c.h.b16 %v127
    %v217 = vunpack.c.l.b16 %v128
    %v218 = vunpack.c.h.b16 %v128
    %v219 = vunpack.c.l.b16 %v129
    %v220 = vunpack.c.h.b16 %v129
    %v221 = vunpack.c.l.b16 %v130
    %v222 = vunpack.c.h.b16 %v130
    %v223 = vunpack.c.l.b16 %v131
    %v224 = vunpack.c.h.b16 %v131
    %v225 = vunpack.c.l.b16 %v132
    %v226 = vunpack.c.h.b16 %v132
    %v227 = vunpack.c.l.b16 %v133
    %v228 = vunpack.c.h.b16 %v133
    %v229 = vunpack.c.l.b16 %v134
    %v230 = vunpack.c.h.b16 %v134
    %v231 = vunpack.c.l.b16 %v135
    %v232 = vunpack.c.h.b16 %v135
    %v233 = vunpack.c.l.b16 %v136
    %v234 = vunpack.c.h.b16 %v136
    %v235 = vunpack.c.l.b16 %v137
    %v236 = vunpack.c.h.b16 %v137
    %v237 = vunpack.c.l.b16 %v138
    %v238 = vunpack.c.h.b16 %v138
    %v239 = vunpack.c.l.b16 %v139
    %v240 = vunpack.c.h.b16 %v139
    %v241 = vunpack.c.l.b16 %v140
    %v242 = vunpack.c.h.b16 %v140
    %v243 = vunpack.c.l.b16 %v141
    %v244 = vunpack.c.h.b16 %v141
    %v245 = vunpack.c.l.b16 %v142
    %v246 = vunpack.c.h.b16 %v142
    %v247 = vunpack.c.l.b16 %v143
    %v248 = vunpack.c.h.b16 %v143
    %v249 = vunpack.c.l.b16 %v144
    %v250 = vunpack.c.h.b16 %v144
    %v251 = vunpack.c.l.b16 %v145
    %v252 = vunpack.c.h.b16 %v145
    %v253 = vunpack.c.l.b16 %v146
    %v254 = vunpack.c.h.b16 %v146
    %v255 = vunpack.c.l.b16 %v147
    %v256 = vunpack.c.h.b16 %v147
    %v257 = vunpack.c.l.b16 %v148
    %v258 = vunpack.c.h.b16 %v148
    %v259 = vunpack.c.l.b16 %v149
    %v260 = vunpack.c.h.b16 %v149
    %v261 = vunpack.c.l.b16 %v150
    %v262 = vunpack.c.h.b16 %v150
    %v263 = vpack.c.b16 %v201, %v199
    %v264 = vpack.c.b16 %v202, %v200
    %v265 = vpack.c.b16 %v205, %v203
    %v266 = vpack.c.b16 %v206, %v204
    %v267 = vpack.c.b16 %v209, %v207
    %v268 = vpack.c.b16 %v210, %v208
    %v269 = vpack.c.b16 %v213, %v211
    %v270 = vpack.c.b16 %v214, %v212
    %v271 = vpack.c.b16 %v217, %v215
    %v272 = vpack.c.b16 %v218, %v216
    %v273 = vpack.c.b16 %v221, %v219
    %v274 = vpack.c.b16 %v222, %v220
    %v275 = vpack.c.b16 %v225, %v223
    %v276 = vpack.c.b16 %v226, %v224
    %v277 = vpack.c.b16 %v229, %v227
    %v278 = vpack.c.b16 %v230, %v228
    %v279 = vpack.c.b16 %v233, %v231
    %v280 = vpack.c.b16 %v234, %v232
    %v281 = vpack.c.b16 %v237, %v235
    %v282 = vpack.c.b16 %v238, %v236
    %v283 = vpack.c.b16 %v241, %v239
    %v284 = vpack.c.b16 %v242, %v240
    %v285 = vpack.c.b16 %v245, %v243
    %v286 = vpack.c.b16 %v246, %v244
    %v287 = vpack.c.b16 %v249, %v247
    %v288 = vpack.c.b16 %v250, %v248
    %v289 = vpack.c.b16 %v253, %v251
    %v290 = vpack.c.b16 %v254, %v252
    %v291 = vpack.c.b16 %v257, %v255
    %v292 = vpack.c.b16 %v258, %v256
    %v293 = vpack.c.b16 %v261, %v259
    %v294 = vpack.c.b16 %v262, %v260
    %327 = vmatpush.bf16.msra.mxu0 %v277
    %328 = vmatpush.bf16.msra.mxu0 %v275
    %329 = vmatpush.bf16.msra.mxu0 %v273
    %330 = vmatpush.bf16.msra.mxu0 %v271
    %331 = vmatpush.bf16.msra.mxu0 %v269
    %332 = vmatpush.bf16.msra.mxu0 %v267
    %333 = vmatpush.bf16.msra.mxu0 %v265
    %334 = vmatpush.bf16.msra.mxu0 %v263
    %335 = vmatmul.bf16.gmra.mxu0 %v163
    %v336 = vpop.f32.mrf.mxu0
    %v337 = vadd.f32 %v153, %v336
    %v338 = vpop.f32.mrf.mxu0
    %v339 = vadd.f32 %v153, %v338
    %340 = vdwg.mxu0
    %341 = vmatpush.bf16.msra.mxu0 %v293
    %342 = vmatpush.bf16.msra.mxu0 %v291
    %343 = vmatpush.bf16.msra.mxu0 %v289
    %344 = vmatpush.bf16.msra.mxu0 %v287
    %345 = vmatpush.bf16.msra.mxu0 %v285
    %346 = vmatpush.bf16.msra.mxu0 %v283
    %347 = vmatpush.bf16.msra.mxu0 %v281
    %348 = vmatpush.bf16.msra.mxu0 %v279
    %349 = vmatmul.bf16.gmra.mxu0 %v164
    %v350 = vpop.f32.mrf.mxu0
    %v351 = vadd.f32 %v337, %v350
    %v352 = vpop.f32.mrf.mxu0
    %v353 = vadd.f32 %v339, %v352
    %354 = vdwg.mxu0
    %355 = vmatpush.bf16.msra.mxu0 %v278
    %356 = vmatpush.bf16.msra.mxu0 %v276
    %357 = vmatpush.bf16.msra.mxu0 %v274
    %358 = vmatpush.bf16.msra.mxu0 %v272
    %359 = vmatpush.bf16.msra.mxu0 %v270
    %360 = vmatpush.bf16.msra.mxu0 %v268
    %361 = vmatpush.bf16.msra.mxu0 %v266
    %362 = vmatpush.bf16.msra.mxu0 %v264
    %363 = vmatmul.bf16.gmra.mxu0 %v163
    %v364 = vpop.f32.mrf.mxu0
    %v365 = vadd.f32 %v154, %v364
    %v366 = vpop.f32.mrf.mxu0
    %v367 = vadd.f32 %v154, %v366
    %368 = vdwg.mxu0
    %369 = vmatpush.bf16.msra.mxu0 %v294
    %370 = vmatpush.bf16.msra.mxu0 %v292
    %371 = vmatpush.bf16.msra.mxu0 %v290
    %372 = vmatpush.bf16.msra.mxu0 %v288
    %373 = vmatpush.bf16.msra.mxu0 %v286
    %374 = vmatpush.bf16.msra.mxu0 %v284
    %375 = vmatpush.bf16.msra.mxu0 %v282
    %376 = vmatpush.bf16.msra.mxu0 %v280
    %377 = vmatmul.bf16.gmra.mxu0 %v164
    %v378 = vpop.f32.mrf.mxu0
    %v379 = vadd.f32 %v365, %v378
    %v380 = vpop.f32.mrf.mxu0
    %v381 = vadd.f32 %v367, %v380
    %382 = vdwg.mxu0
    %v383 = vxor.u32 %v351, 2147483648
    %v384 = vxor.u32 %v379, 2147483648
    %v385 = vxor.u32 %v353, 2147483648
    %v386 = vxor.u32 %v381, 2147483648
    %v387 = vmul.f32 %v383, 1.442695
    %v388 = vpow.pop %v387
    %v389 = vmul.f32 %v384, 1.442695
    %v390 = vpow.pop %v389
    %v391 = vmul.f32 %v385, 1.442695
    %v392 = vpow.pop %v391
    %v393 = vmul.f32 %v386, 1.442695
    %v394 = vpow.pop %v393
    %v395 = vadd.f32 %v388, 1.0
    %v396 = vadd.f32 %v390, 1.0
    %v397 = vadd.f32 %v392, 1.0
    %v398 = vadd.f32 %v394, 1.0
    %v399 = vrcp.pop %v395
    %v400 = vmul.f32 %v395, %v399
    %v401 = vsub.f32 1.0, %v400
    %v402 = vmul.f32 %v399, %v401
    %v403 = vadd.f32 %v399, %v402
    %vm404 = vweird.f32 %v395
    %vm405 = vweird.f32 %v399
    %vm406 = vmor %vm404, %vm405
    %v407 = vsel %vm406, %v399, %v403
    %v408 = vand.u32 2147483647, %v395
    %vm409 = vcmp.eq.f32.partialorder %v408, 8.507059e+37
    %v410 = vand.u32 %v395, 2147483648
    %v411 = vor.u32 1.1754944e-38, %v410
    %v412 = vsel %vm409, %v411, %v407
    %v413 = vmul.f32 1.0, %v412
    %v414 = vrcp.pop %v396
    %v415 = vmul.f32 %v396, %v414
    %v416 = vsub.f32 1.0, %v415
    %v417 = vmul.f32 %v414, %v416
    %v418 = vadd.f32 %v414, %v417
    %vm419 = vweird.f32 %v396
    %vm420 = vweird.f32 %v414
    %vm421 = vmor %vm419, %vm420
    %v422 = vsel %vm421, %v414, %v418
    %v423 = vand.u32 2147483647, %v396
    %vm424 = vcmp.eq.f32.partialorder %v423, 8.507059e+37
    %v425 = vand.u32 %v396, 2147483648
    %v426 = vor.u32 1.1754944e-38, %v425
    %v427 = vsel %vm424, %v426, %v422
    %v428 = vmul.f32 1.0, %v427
    %v429 = vrcp.pop %v397
    %v430 = vmul.f32 %v397, %v429
    %v431 = vsub.f32 1.0, %v430
    %v432 = vmul.f32 %v429, %v431
    %v433 = vadd.f32 %v429, %v432
    %vm434 = vweird.f32 %v397
    %vm435 = vweird.f32 %v429
    %vm436 = vmor %vm434, %vm435
    %v437 = vsel %vm436, %v429, %v433
    %v438 = vand.u32 2147483647, %v397
    %vm439 = vcmp.eq.f32.partialorder %v438, 8.507059e+37
    %v440 = vand.u32 %v397, 2147483648
    %v441 = vor.u32 1.1754944e-38, %v440
    %v442 = vsel %vm439, %v441, %v437
    %v443 = vmul.f32 1.0, %v442
    %v444 = vrcp.pop %v398
    %v445 = vmul.f32 %v398, %v444
    %v446 = vsub.f32 1.0, %v445
    %v447 = vmul.f32 %v444, %v446
    %v448 = vadd.f32 %v444, %v447
    %vm449 = vweird.f32 %v398
    %vm450 = vweird.f32 %v444
    %vm451 = vmor %vm449, %vm450
    %v452 = vsel %vm451, %v444, %v448
    %v453 = vand.u32 2147483647, %v398
    %vm454 = vcmp.eq.f32.partialorder %v453, 8.507059e+37
    %v455 = vand.u32 %v398, 2147483648
    %v456 = vor.u32 1.1754944e-38, %v455
    %v457 = vsel %vm454, %v456, %v452
    %v458 = vmul.f32 1.0, %v457
    %v459 = vmul.f32 %v351, %v413
    %v460 = vmul.f32 %v379, %v428
    %v461 = vmul.f32 %v353, %v443
    %v462 = vmul.f32 %v381, %v458
    %v463 = vpack.c.bf16 %v461, %v459
    %v464 = vpack.c.bf16 %v462, %v460
    %v465 = vld [vmem:[#allocation8] sm:$0xff]
    %v466 = vld [vmem:[#allocation8 + $0x8] sm:$0xff]
    %v467 = vld [vmem:[#allocation8 + $0x10] sm:$0xff]
    %v468 = vld [vmem:[#allocation8 + $0x18] sm:$0xff]
    %v469 = vld [vmem:[#allocation8 + $0x20] sm:$0xff]
    %v470 = vld [vmem:[#allocation8 + $0x28] sm:$0xff]
    %v471 = vld [vmem:[#allocation8 + $0x30] sm:$0xff]
    %v472 = vld [vmem:[#allocation8 + $0x38] sm:$0xff]
    %v473 = vld [vmem:[#allocation8 + $0x40] sm:$0xff]
    %v474 = vld [vmem:[#allocation8 + $0x48] sm:$0xff]
    %v475 = vld [vmem:[#allocation8 + $0x50] sm:$0xff]
    %v476 = vld [vmem:[#allocation8 + $0x58] sm:$0xff]
    %v477 = vld [vmem:[#allocation8 + $0x60] sm:$0xff]
    %v478 = vld [vmem:[#allocation8 + $0x68] sm:$0xff]
    %v479 = vld [vmem:[#allocation8 + $0x70] sm:$0xff]
    %v480 = vld [vmem:[#allocation8 + $0x78] sm:$0xff]
    %v481 = vld [vmem:[#allocation8 + $0x80] sm:$0xff]
    %v482 = vld [vmem:[#allocation8 + $0x88] sm:$0xff]
    %v483 = vld [vmem:[#allocation8 + $0x90] sm:$0xff]
    %v484 = vld [vmem:[#allocation8 + $0x98] sm:$0xff]
    %v485 = vld [vmem:[#allocation8 + $0xa0] sm:$0xff]
    %v486 = vld [vmem:[#allocation8 + $0xa8] sm:$0xff]
    %v487 = vld [vmem:[#allocation8 + $0xb0] sm:$0xff]
    %v488 = vld [vmem:[#allocation8 + $0xb8] sm:$0xff]
    %v489 = vld [vmem:[#allocation8 + $0xc0] sm:$0xff]
    %v490 = vld [vmem:[#allocation8 + $0xc8] sm:$0xff]
    %v491 = vld [vmem:[#allocation8 + $0xd0] sm:$0xff]
    %v492 = vld [vmem:[#allocation8 + $0xd8] sm:$0xff]
    %v493 = vld [vmem:[#allocation8 + $0xe0] sm:$0xff]
    %v494 = vld [vmem:[#allocation8 + $0xe8] sm:$0xff]
    %v495 = vld [vmem:[#allocation8 + $0xf0] sm:$0xff]
    %v496 = vld [vmem:[#allocation8 + $0xf8] sm:$0xff]
    %v497 = vld [vmem:[#allocation8 + $0x100] sm:$0xff]
    %v498 = vld [vmem:[#allocation8 + $0x108] sm:$0xff]
    %v499 = vld [vmem:[#allocation8 + $0x110] sm:$0xff]
    %v500 = vld [vmem:[#allocation8 + $0x118] sm:$0xff]
    %v501 = vld [vmem:[#allocation8 + $0x120] sm:$0xff]
    %v502 = vld [vmem:[#allocation8 + $0x128] sm:$0xff]
    %v503 = vld [vmem:[#allocation8 + $0x130] sm:$0xff]
    %v504 = vld [vmem:[#allocation8 + $0x138] sm:$0xff]
    %v505 = vld [vmem:[#allocation8 + $0x140] sm:$0xff]
    %v506 = vld [vmem:[#allocation8 + $0x148] sm:$0xff]
    %v507 = vld [vmem:[#allocation8 + $0x150] sm:$0xff]
    %v508 = vld [vmem:[#allocation8 + $0x158] sm:$0xff]
    %v509 = vld [vmem:[#allocation8 + $0x160] sm:$0xff]
    %v510 = vld [vmem:[#allocation8 + $0x168] sm:$0xff]
    %v511 = vld [vmem:[#allocation8 + $0x170] sm:$0xff]
    %v512 = vld [vmem:[#allocation8 + $0x178] sm:$0xff]
    %v513 = vld [vmem:[#allocation8 + $0x180] sm:$0xff]
    %v514 = vld [vmem:[#allocation8 + $0x188] sm:$0xff]
    %v515 = vld [vmem:[#allocation8 + $0x190] sm:$0xff]
    %v516 = vld [vmem:[#allocation8 + $0x198] sm:$0xff]
    %v517 = vld [vmem:[#allocation8 + $0x1a0] sm:$0xff]
    %v518 = vld [vmem:[#allocation8 + $0x1a8] sm:$0xff]
    %v519 = vld [vmem:[#allocation8 + $0x1b0] sm:$0xff]
    %v520 = vld [vmem:[#allocation8 + $0x1b8] sm:$0xff]
    %v521 = vld [vmem:[#allocation8 + $0x1c0] sm:$0xff]
    %v522 = vld [vmem:[#allocation8 + $0x1c8] sm:$0xff]
    %v523 = vld [vmem:[#allocation8 + $0x1d0] sm:$0xff]
    %v524 = vld [vmem:[#allocation8 + $0x1d8] sm:$0xff]
    %v525 = vld [vmem:[#allocation8 + $0x1e0] sm:$0xff]
    %v526 = vld [vmem:[#allocation8 + $0x1e8] sm:$0xff]
    %v527 = vld [vmem:[#allocation8 + $0x1f0] sm:$0xff]
    %v528 = vld [vmem:[#allocation8 + $0x1f8] sm:$0xff]
    %v529 = vld [vmem:[#allocation8 + $0x200] sm:$0xff]
    %v530 = vld [vmem:[#allocation8 + $0x208] sm:$0xff]
    %v531 = vld [vmem:[#allocation8 + $0x210] sm:$0xff]
    %v532 = vld [vmem:[#allocation8 + $0x218] sm:$0xff]
    %v533 = vld [vmem:[#allocation8 + $0x220] sm:$0xff]
    %v534 = vld [vmem:[#allocation8 + $0x228] sm:$0xff]
    %v535 = vld [vmem:[#allocation8 + $0x230] sm:$0xff]
    %v536 = vld [vmem:[#allocation8 + $0x238] sm:$0xff]
    %v537 = vld [vmem:[#allocation8 + $0x240] sm:$0xff]
    %v538 = vld [vmem:[#allocation8 + $0x248] sm:$0xff]
    %v539 = vld [vmem:[#allocation8 + $0x250] sm:$0xff]
    %v540 = vld [vmem:[#allocation8 + $0x258] sm:$0xff]
    %v541 = vld [vmem:[#allocation8 + $0x260] sm:$0xff]
    %v542 = vld [vmem:[#allocation8 + $0x268] sm:$0xff]
    %v543 = vld [vmem:[#allocation8 + $0x270] sm:$0xff]
    %v544 = vld [vmem:[#allocation8 + $0x278] sm:$0xff]
    %v545 = vld [vmem:[#allocation8 + $0x280] sm:$0xff]
    %v546 = vld [vmem:[#allocation8 + $0x288] sm:$0xff]
    %v547 = vld [vmem:[#allocation8 + $0x290] sm:$0xff]
    %v548 = vld [vmem:[#allocation8 + $0x298] sm:$0xff]
    %v549 = vld [vmem:[#allocation8 + $0x2a0] sm:$0xff]
    %v550 = vld [vmem:[#allocation8 + $0x2a8] sm:$0xff]
    %v551 = vld [vmem:[#allocation8 + $0x2b0] sm:$0xff]
    %v552 = vld [vmem:[#allocation8 + $0x2b8] sm:$0xff]
    %v553 = vld [vmem:[#allocation8 + $0x2c0] sm:$0xff]
    %v554 = vld [vmem:[#allocation8 + $0x2c8] sm:$0xff]
    %v555 = vld [vmem:[#allocation8 + $0x2d0] sm:$0xff]
    %v556 = vld [vmem:[#allocation8 + $0x2d8] sm:$0xff]
    %v557 = vld [vmem:[#allocation8 + $0x2e0] sm:$0xff]
    %v558 = vld [vmem:[#allocation8 + $0x2e8] sm:$0xff]
    %v559 = vld [vmem:[#allocation8 + $0x2f0] sm:$0xff]
    %v560 = vld [vmem:[#allocation8 + $0x2f8] sm:$0xff]
    %v561 = vld [vmem:[#allocation8 + $0x300] sm:$0xff]
    %v562 = vld [vmem:[#allocation8 + $0x308] sm:$0xff]
    %v563 = vld [vmem:[#allocation8 + $0x310] sm:$0xff]
    %v564 = vld [vmem:[#allocation8 + $0x318] sm:$0xff]
    %v565 = vld [vmem:[#allocation8 + $0x320] sm:$0xff]
    %v566 = vld [vmem:[#allocation8 + $0x328] sm:$0xff]
    %v567 = vld [vmem:[#allocation8 + $0x330] sm:$0xff]
    %v568 = vld [vmem:[#allocation8 + $0x338] sm:$0xff]
    %v569 = vld [vmem:[#allocation8 + $0x340] sm:$0xff]
    %v570 = vld [vmem:[#allocation8 + $0x348] sm:$0xff]
    %v571 = vld [vmem:[#allocation8 + $0x350] sm:$0xff]
    %v572 = vld [vmem:[#allocation8 + $0x358] sm:$0xff]
    %v573 = vld [vmem:[#allocation8 + $0x360] sm:$0xff]
    %v574 = vld [vmem:[#allocation8 + $0x368] sm:$0xff]
    %v575 = vld [vmem:[#allocation8 + $0x370] sm:$0xff]
    %v576 = vld [vmem:[#allocation8 + $0x378] sm:$0xff]
    %v577 = vld [vmem:[#allocation8 + $0x380] sm:$0xff]
    %v578 = vld [vmem:[#allocation8 + $0x388] sm:$0xff]
    %v579 = vld [vmem:[#allocation8 + $0x390] sm:$0xff]
    %v580 = vld [vmem:[#allocation8 + $0x398] sm:$0xff]
    %v581 = vld [vmem:[#allocation8 + $0x3a0] sm:$0xff]
    %v582 = vld [vmem:[#allocation8 + $0x3a8] sm:$0xff]
    %v583 = vld [vmem:[#allocation8 + $0x3b0] sm:$0xff]
    %v584 = vld [vmem:[#allocation8 + $0x3b8] sm:$0xff]
    %v585 = vld [vmem:[#allocation8 + $0x3c0] sm:$0xff]
    %v586 = vld [vmem:[#allocation8 + $0x3c8] sm:$0xff]
    %v587 = vld [vmem:[#allocation8 + $0x3d0] sm:$0xff]
    %v588 = vld [vmem:[#allocation8 + $0x3d8] sm:$0xff]
    %v589 = vld [vmem:[#allocation8 + $0x3e0] sm:$0xff]
    %v590 = vld [vmem:[#allocation8 + $0x3e8] sm:$0xff]
    %v591 = vld [vmem:[#allocation8 + $0x3f0] sm:$0xff]
    %v592 = vld [vmem:[#allocation8 + $0x3f8] sm:$0xff]
    %v593 = vld [vmem:[#allocation10] sm:$0xff]
    %v595 = vperm.slane %v593, 0
    %v596 = vperm.slane %v593, 1
    %v597 = vperm.slane %v593, 2
    %v598 = vperm.slane %v593, 3
    %v599 = vperm.slane %v593, 4
    %v600 = vperm.slane %v593, 5
    %v601 = vperm.slane %v593, 6
    %v602 = vperm.slane %v593, 7
    %v739 = vunpack.c.l.b16 %v465
    %v740 = vunpack.c.h.b16 %v465
    %v741 = vunpack.c.l.b16 %v466
    %v742 = vunpack.c.h.b16 %v466
    %v743 = vunpack.c.l.b16 %v467
    %v744 = vunpack.c.h.b16 %v467
    %v745 = vunpack.c.l.b16 %v468
    %v746 = vunpack.c.h.b16 %v468
    %v747 = vunpack.c.l.b16 %v469
    %v748 = vunpack.c.h.b16 %v469
    %v749 = vunpack.c.l.b16 %v470
    %v750 = vunpack.c.h.b16 %v470
    %v751 = vunpack.c.l.b16 %v471
    %v752 = vunpack.c.h.b16 %v471
    %v753 = vunpack.c.l.b16 %v472
    %v754 = vunpack.c.h.b16 %v472
    %v755 = vunpack.c.l.b16 %v473
    %v756 = vunpack.c.h.b16 %v473
    %v757 = vunpack.c.l.b16 %v474
    %v758 = vunpack.c.h.b16 %v474
    %v759 = vunpack.c.l.b16 %v475
    %v760 = vunpack.c.h.b16 %v475
    %v761 = vunpack.c.l.b16 %v476
    %v762 = vunpack.c.h.b16 %v476
    %v763 = vunpack.c.l.b16 %v477
    %v764 = vunpack.c.h.b16 %v477
    %v765 = vunpack.c.l.b16 %v478
    %v766 = vunpack.c.h.b16 %v478
    %v767 = vunpack.c.l.b16 %v479
    %v768 = vunpack.c.h.b16 %v479
    %v769 = vunpack.c.l.b16 %v480
    %v770 = vunpack.c.h.b16 %v480
    %v771 = vunpack.c.l.b16 %v481
    %v772 = vunpack.c.h.b16 %v481
    %v773 = vunpack.c.l.b16 %v482
    %v774 = vunpack.c.h.b16 %v482
    %v775 = vunpack.c.l.b16 %v483
    %v776 = vunpack.c.h.b16 %v483
    %v777 = vunpack.c.l.b16 %v484
    %v778 = vunpack.c.h.b16 %v484
    %v779 = vunpack.c.l.b16 %v485
    %v780 = vunpack.c.h.b16 %v485
    %v781 = vunpack.c.l.b16 %v486
    %v782 = vunpack.c.h.b16 %v486
    %v783 = vunpack.c.l.b16 %v487
    %v784 = vunpack.c.h.b16 %v487
    %v785 = vunpack.c.l.b16 %v488
    %v786 = vunpack.c.h.b16 %v488
    %v787 = vunpack.c.l.b16 %v489
    %v788 = vunpack.c.h.b16 %v489
    %v789 = vunpack.c.l.b16 %v490
    %v790 = vunpack.c.h.b16 %v490
    %v791 = vunpack.c.l.b16 %v491
    %v792 = vunpack.c.h.b16 %v491
    %v793 = vunpack.c.l.b16 %v492
    %v794 = vunpack.c.h.b16 %v492
    %v795 = vunpack.c.l.b16 %v493
    %v796 = vunpack.c.h.b16 %v493
    %v797 = vunpack.c.l.b16 %v494
    %v798 = vunpack.c.h.b16 %v494
    %v799 = vunpack.c.l.b16 %v495
    %v800 = vunpack.c.h.b16 %v495
    %v801 = vunpack.c.l.b16 %v496
    %v802 = vunpack.c.h.b16 %v496
    %v803 = vunpack.c.l.b16 %v497
    %v804 = vunpack.c.h.b16 %v497
    %v805 = vunpack.c.l.b16 %v498
    %v806 = vunpack.c.h.b16 %v498
    %v807 = vunpack.c.l.b16 %v499
    %v808 = vunpack.c.h.b16 %v499
    %v809 = vunpack.c.l.b16 %v500
    %v810 = vunpack.c.h.b16 %v500
    %v811 = vunpack.c.l.b16 %v501
    %v812 = vunpack.c.h.b16 %v501
    %v813 = vunpack.c.l.b16 %v502
    %v814 = vunpack.c.h.b16 %v502
    %v815 = vunpack.c.l.b16 %v503
    %v816 = vunpack.c.h.b16 %v503
    %v817 = vunpack.c.l.b16 %v504
    %v818 = vunpack.c.h.b16 %v504
    %v819 = vunpack.c.l.b16 %v505
    %v820 = vunpack.c.h.b16 %v505
    %v821 = vunpack.c.l.b16 %v506
    %v822 = vunpack.c.h.b16 %v506
    %v823 = vunpack.c.l.b16 %v507
    %v824 = vunpack.c.h.b16 %v507
    %v825 = vunpack.c.l.b16 %v508
    %v826 = vunpack.c.h.b16 %v508
    %v827 = vunpack.c.l.b16 %v509
    %v828 = vunpack.c.h.b16 %v509
    %v829 = vunpack.c.l.b16 %v510
    %v830 = vunpack.c.h.b16 %v510
    %v831 = vunpack.c.l.b16 %v511
    %v832 = vunpack.c.h.b16 %v511
    %v833 = vunpack.c.l.b16 %v512
    %v834 = vunpack.c.h.b16 %v512
    %v835 = vunpack.c.l.b16 %v513
    %v836 = vunpack.c.h.b16 %v513
    %v837 = vunpack.c.l.b16 %v514
    %v838 = vunpack.c.h.b16 %v514
    %v839 = vunpack.c.l.b16 %v515
    %v840 = vunpack.c.h.b16 %v515
    %v841 = vunpack.c.l.b16 %v516
    %v842 = vunpack.c.h.b16 %v516
    %v843 = vunpack.c.l.b16 %v517
    %v844 = vunpack.c.h.b16 %v517
    %v845 = vunpack.c.l.b16 %v518
    %v846 = vunpack.c.h.b16 %v518
    %v847 = vunpack.c.l.b16 %v519
    %v848 = vunpack.c.h.b16 %v519
    %v849 = vunpack.c.l.b16 %v520
    %v850 = vunpack.c.h.b16 %v520
    %v851 = vunpack.c.l.b16 %v521
    %v852 = vunpack.c.h.b16 %v521
    %v853 = vunpack.c.l.b16 %v522
    %v854 = vunpack.c.h.b16 %v522
    %v855 = vunpack.c.l.b16 %v523
    %v856 = vunpack.c.h.b16 %v523
    %v857 = vunpack.c.l.b16 %v524
    %v858 = vunpack.c.h.b16 %v524
    %v859 = vunpack.c.l.b16 %v525
    %v860 = vunpack.c.h.b16 %v525
    %v861 = vunpack.c.l.b16 %v526
    %v862 = vunpack.c.h.b16 %v526
    %v863 = vunpack.c.l.b16 %v527
    %v864 = vunpack.c.h.b16 %v527
    %v865 = vunpack.c.l.b16 %v528
    %v866 = vunpack.c.h.b16 %v528
    %v867 = vunpack.c.l.b16 %v529
    %v868 = vunpack.c.h.b16 %v529
    %v869 = vunpack.c.l.b16 %v530
    %v870 = vunpack.c.h.b16 %v530
    %v871 = vunpack.c.l.b16 %v531
    %v872 = vunpack.c.h.b16 %v531
    %v873 = vunpack.c.l.b16 %v532
    %v874 = vunpack.c.h.b16 %v532
    %v875 = vunpack.c.l.b16 %v533
    %v876 = vunpack.c.h.b16 %v533
    %v877 = vunpack.c.l.b16 %v534
    %v878 = vunpack.c.h.b16 %v534
    %v879 = vunpack.c.l.b16 %v535
    %v880 = vunpack.c.h.b16 %v535
    %v881 = vunpack.c.l.b16 %v536
    %v882 = vunpack.c.h.b16 %v536
    %v883 = vunpack.c.l.b16 %v537
    %v884 = vunpack.c.h.b16 %v537
    %v885 = vunpack.c.l.b16 %v538
    %v886 = vunpack.c.h.b16 %v538
    %v887 = vunpack.c.l.b16 %v539
    %v888 = vunpack.c.h.b16 %v539
    %v889 = vunpack.c.l.b16 %v540
    %v890 = vunpack.c.h.b16 %v540
    %v891 = vunpack.c.l.b16 %v541
    %v892 = vunpack.c.h.b16 %v541
    %v893 = vunpack.c.l.b16 %v542
    %v894 = vunpack.c.h.b16 %v542
    %v895 = vunpack.c.l.b16 %v543
    %v896 = vunpack.c.h.b16 %v543
    %v897 = vunpack.c.l.b16 %v544
    %v898 = vunpack.c.h.b16 %v544
    %v899 = vunpack.c.l.b16 %v545
    %v900 = vunpack.c.h.b16 %v545
    %v901 = vunpack.c.l.b16 %v546
    %v902 = vunpack.c.h.b16 %v546
    %v903 = vunpack.c.l.b16 %v547
    %v904 = vunpack.c.h.b16 %v547
    %v905 = vunpack.c.l.b16 %v548
    %v906 = vunpack.c.h.b16 %v548
    %v907 = vunpack.c.l.b16 %v549
    %v908 = vunpack.c.h.b16 %v549
    %v909 = vunpack.c.l.b16 %v550
    %v910 = vunpack.c.h.b16 %v550
    %v911 = vunpack.c.l.b16 %v551
    %v912 = vunpack.c.h.b16 %v551
    %v913 = vunpack.c.l.b16 %v552
    %v914 = vunpack.c.h.b16 %v552
    %v915 = vunpack.c.l.b16 %v553
    %v916 = vunpack.c.h.b16 %v553
    %v917 = vunpack.c.l.b16 %v554
    %v918 = vunpack.c.h.b16 %v554
    %v919 = vunpack.c.l.b16 %v555
    %v920 = vunpack.c.h.b16 %v555
    %v921 = vunpack.c.l.b16 %v556
    %v922 = vunpack.c.h.b16 %v556
    %v923 = vunpack.c.l.b16 %v557
    %v924 = vunpack.c.h.b16 %v557
    %v925 = vunpack.c.l.b16 %v558
    %v926 = vunpack.c.h.b16 %v558
    %v927 = vunpack.c.l.b16 %v559
    %v928 = vunpack.c.h.b16 %v559
    %v929 = vunpack.c.l.b16 %v560
    %v930 = vunpack.c.h.b16 %v560
    %v931 = vunpack.c.l.b16 %v561
    %v932 = vunpack.c.h.b16 %v561
    %v933 = vunpack.c.l.b16 %v562
    %v934 = vunpack.c.h.b16 %v562
    %v935 = vunpack.c.l.b16 %v563
    %v936 = vunpack.c.h.b16 %v563
    %v937 = vunpack.c.l.b16 %v564
    %v938 = vunpack.c.h.b16 %v564
    %v939 = vunpack.c.l.b16 %v565
    %v940 = vunpack.c.h.b16 %v565
    %v941 = vunpack.c.l.b16 %v566
    %v942 = vunpack.c.h.b16 %v566
    %v943 = vunpack.c.l.b16 %v567
    %v944 = vunpack.c.h.b16 %v567
    %v945 = vunpack.c.l.b16 %v568
    %v946 = vunpack.c.h.b16 %v568
    %v947 = vunpack.c.l.b16 %v569
    %v948 = vunpack.c.h.b16 %v569
    %v949 = vunpack.c.l.b16 %v570
    %v950 = vunpack.c.h.b16 %v570
    %v951 = vunpack.c.l.b16 %v571
    %v952 = vunpack.c.h.b16 %v571
    %v953 = vunpack.c.l.b16 %v572
    %v954 = vunpack.c.h.b16 %v572
    %v955 = vunpack.c.l.b16 %v573
    %v956 = vunpack.c.h.b16 %v573
    %v957 = vunpack.c.l.b16 %v574
    %v958 = vunpack.c.h.b16 %v574
    %v959 = vunpack.c.l.b16 %v575
    %v960 = vunpack.c.h.b16 %v575
    %v961 = vunpack.c.l.b16 %v576
    %v962 = vunpack.c.h.b16 %v576
    %v963 = vunpack.c.l.b16 %v577
    %v964 = vunpack.c.h.b16 %v577
    %v965 = vunpack.c.l.b16 %v578
    %v966 = vunpack.c.h.b16 %v578
    %v967 = vunpack.c.l.b16 %v579
    %v968 = vunpack.c.h.b16 %v579
    %v969 = vunpack.c.l.b16 %v580
    %v970 = vunpack.c.h.b16 %v580
    %v971 = vunpack.c.l.b16 %v581
    %v972 = vunpack.c.h.b16 %v581
    %v973 = vunpack.c.l.b16 %v582
    %v974 = vunpack.c.h.b16 %v582
    %v975 = vunpack.c.l.b16 %v583
    %v976 = vunpack.c.h.b16 %v583
    %v977 = vunpack.c.l.b16 %v584
    %v978 = vunpack.c.h.b16 %v584
    %v979 = vunpack.c.l.b16 %v585
    %v980 = vunpack.c.h.b16 %v585
    %v981 = vunpack.c.l.b16 %v586
    %v982 = vunpack.c.h.b16 %v586
    %v983 = vunpack.c.l.b16 %v587
    %v984 = vunpack.c.h.b16 %v587
    %v985 = vunpack.c.l.b16 %v588
    %v986 = vunpack.c.h.b16 %v588
    %v987 = vunpack.c.l.b16 %v589
    %v988 = vunpack.c.h.b16 %v589
    %v989 = vunpack.c.l.b16 %v590
    %v990 = vunpack.c.h.b16 %v590
    %v991 = vunpack.c.l.b16 %v591
    %v992 = vunpack.c.h.b16 %v591
    %v993 = vunpack.c.l.b16 %v592
    %v994 = vunpack.c.h.b16 %v592
    %v995 = vpack.c.b16 %v747, %v739
    %v996 = vpack.c.b16 %v748, %v740
    %v997 = vpack.c.b16 %v749, %v741
    %v998 = vpack.c.b16 %v750, %v742
    %v999 = vpack.c.b16 %v751, %v743
    %v1000 = vpack.c.b16 %v752, %v744
    %v1001 = vpack.c.b16 %v753, %v745
    %v1002 = vpack.c.b16 %v754, %v746
    %v1003 = vpack.c.b16 %v763, %v755
    %v1004 = vpack.c.b16 %v764, %v756
    %v1005 = vpack.c.b16 %v765, %v757
    %v1006 = vpack.c.b16 %v766, %v758
    %v1007 = vpack.c.b16 %v767, %v759
    %v1008 = vpack.c.b16 %v768, %v760
    %v1009 = vpack.c.b16 %v769, %v761
    %v1010 = vpack.c.b16 %v770, %v762
    %v1011 = vpack.c.b16 %v779, %v771
    %v1012 = vpack.c.b16 %v780, %v772
    %v1013 = vpack.c.b16 %v781, %v773
    %v1014 = vpack.c.b16 %v782, %v774
    %v1015 = vpack.c.b16 %v783, %v775
    %v1016 = vpack.c.b16 %v784, %v776
    %v1017 = vpack.c.b16 %v785, %v777
    %v1018 = vpack.c.b16 %v786, %v778
    %v1019 = vpack.c.b16 %v795, %v787
    %v1020 = vpack.c.b16 %v796, %v788
    %v1021 = vpack.c.b16 %v797, %v789
    %v1022 = vpack.c.b16 %v798, %v790
    %v1023 = vpack.c.b16 %v799, %v791
    %v1024 = vpack.c.b16 %v800, %v792
    %v1025 = vpack.c.b16 %v801, %v793
    %v1026 = vpack.c.b16 %v802, %v794
    %v1027 = vpack.c.b16 %v811, %v803
    %v1028 = vpack.c.b16 %v812, %v804
    %v1029 = vpack.c.b16 %v813, %v805
    %v1030 = vpack.c.b16 %v814, %v806
    %v1031 = vpack.c.b16 %v815, %v807
    %v1032 = vpack.c.b16 %v816, %v808
    %v1033 = vpack.c.b16 %v817, %v809
    %v1034 = vpack.c.b16 %v818, %v810
    %v1035 = vpack.c.b16 %v827, %v819
    %v1036 = vpack.c.b16 %v828, %v820
    %v1037 = vpack.c.b16 %v829, %v821
    %v1038 = vpack.c.b16 %v830, %v822
    %v1039 = vpack.c.b16 %v831, %v823
    %v1040 = vpack.c.b16 %v832, %v824
    %v1041 = vpack.c.b16 %v833, %v825
    %v1042 = vpack.c.b16 %v834, %v826
    %v1043 = vpack.c.b16 %v843, %v835
    %v1044 = vpack.c.b16 %v844, %v836
    %v1045 = vpack.c.b16 %v845, %v837
    %v1046 = vpack.c.b16 %v846, %v838
    %v1047 = vpack.c.b16 %v847, %v839
    %v1048 = vpack.c.b16 %v848, %v840
    %v1049 = vpack.c.b16 %v849, %v841
    %v1050 = vpack.c.b16 %v850, %v842
    %v1051 = vpack.c.b16 %v859, %v851
    %v1052 = vpack.c.b16 %v860, %v852
    %v1053 = vpack.c.b16 %v861, %v853
    %v1054 = vpack.c.b16 %v862, %v854
    %v1055 = vpack.c.b16 %v863, %v855
    %v1056 = vpack.c.b16 %v864, %v856
    %v1057 = vpack.c.b16 %v865, %v857
    %v1058 = vpack.c.b16 %v866, %v858
    %v1059 = vpack.c.b16 %v875, %v867
    %v1060 = vpack.c.b16 %v876, %v868
    %v1061 = vpack.c.b16 %v877, %v869
    %v1062 = vpack.c.b16 %v878, %v870
    %v1063 = vpack.c.b16 %v879, %v871
    %v1064 = vpack.c.b16 %v880, %v872
    %v1065 = vpack.c.b16 %v881, %v873
    %v1066 = vpack.c.b16 %v882, %v874
    %v1067 = vpack.c.b16 %v891, %v883
    %v1068 = vpack.c.b16 %v892, %v884
    %v1069 = vpack.c.b16 %v893, %v885
    %v1070 = vpack.c.b16 %v894, %v886
    %v1071 = vpack.c.b16 %v895, %v887
    %v1072 = vpack.c.b16 %v896, %v888
    %v1073 = vpack.c.b16 %v897, %v889
    %v1074 = vpack.c.b16 %v898, %v890
    %v1075 = vpack.c.b16 %v907, %v899
    %v1076 = vpack.c.b16 %v908, %v900
    %v1077 = vpack.c.b16 %v909, %v901
    %v1078 = vpack.c.b16 %v910, %v902
    %v1079 = vpack.c.b16 %v911, %v903
    %v1080 = vpack.c.b16 %v912, %v904
    %v1081 = vpack.c.b16 %v913, %v905
    %v1082 = vpack.c.b16 %v914, %v906
    %v1083 = vpack.c.b16 %v923, %v915
    %v1084 = vpack.c.b16 %v924, %v916
    %v1085 = vpack.c.b16 %v925, %v917
    %v1086 = vpack.c.b16 %v926, %v918
    %v1087 = vpack.c.b16 %v927, %v919
    %v1088 = vpack.c.b16 %v928, %v920
    %v1089 = vpack.c.b16 %v929, %v921
    %v1090 = vpack.c.b16 %v930, %v922
    %v1091 = vpack.c.b16 %v939, %v931
    %v1092 = vpack.c.b16 %v940, %v932
    %v1093 = vpack.c.b16 %v941, %v933
    %v1094 = vpack.c.b16 %v942, %v934
    %v1095 = vpack.c.b16 %v943, %v935
    %v1096 = vpack.c.b16 %v944, %v936
    %v1097 = vpack.c.b16 %v945, %v937
    %v1098 = vpack.c.b16 %v946, %v938
    %v1099 = vpack.c.b16 %v955, %v947
    %v1100 = vpack.c.b16 %v956, %v948
    %v1101 = vpack.c.b16 %v957, %v949
    %v1102 = vpack.c.b16 %v958, %v950
    %v1103 = vpack.c.b16 %v959, %v951
    %v1104 = vpack.c.b16 %v960, %v952
    %v1105 = vpack.c.b16 %v961, %v953
    %v1106 = vpack.c.b16 %v962, %v954
    %v1107 = vpack.c.b16 %v971, %v963
    %v1108 = vpack.c.b16 %v972, %v964
    %v1109 = vpack.c.b16 %v973, %v965
    %v1110 = vpack.c.b16 %v974, %v966
    %v1111 = vpack.c.b16 %v975, %v967
    %v1112 = vpack.c.b16 %v976, %v968
    %v1113 = vpack.c.b16 %v977, %v969
    %v1114 = vpack.c.b16 %v978, %v970
    %v1115 = vpack.c.b16 %v987, %v979
    %v1116 = vpack.c.b16 %v988, %v980
    %v1117 = vpack.c.b16 %v989, %v981
    %v1118 = vpack.c.b16 %v990, %v982
    %v1119 = vpack.c.b16 %v991, %v983
    %v1120 = vpack.c.b16 %v992, %v984
    %v1121 = vpack.c.b16 %v993, %v985
    %v1122 = vpack.c.b16 %v994, %v986
    %1251 = vmatpush.bf16.msra.mxu0 %v1051
    %1252 = vmatpush.bf16.msra.mxu0 %v1043
    %1253 = vmatpush.bf16.msra.mxu0 %v1035
    %1254 = vmatpush.bf16.msra.mxu0 %v1027
    %1255 = vmatpush.bf16.msra.mxu0 %v1019
    %1256 = vmatpush.bf16.msra.mxu0 %v1011
    %1257 = vmatpush.bf16.msra.mxu0 %v1003
    %1258 = vmatpush.bf16.msra.mxu0 %v995
    %1259 = vmatmul.bf16.gmra.mxu0 %v463
    %v1260 = vpop.f32.mrf.mxu0
    %v1261 = vadd.f32 %v595, %v1260
    %v1262 = vpop.f32.mrf.mxu0
    %v1263 = vadd.f32 %v595, %v1262
    %1264 = vdwg.mxu0
    %1265 = vmatpush.bf16.msra.mxu0 %v1115
    %1266 = vmatpush.bf16.msra.mxu0 %v1107
    %1267 = vmatpush.bf16.msra.mxu0 %v1099
    %1268 = vmatpush.bf16.msra.mxu0 %v1091
    %1269 = vmatpush.bf16.msra.mxu0 %v1083
    %1270 = vmatpush.bf16.msra.mxu0 %v1075
    %1271 = vmatpush.bf16.msra.mxu0 %v1067
    %1272 = vmatpush.bf16.msra.mxu0 %v1059
    %1273 = vmatmul.bf16.gmra.mxu0 %v464
    %v1274 = vpop.f32.mrf.mxu0
    %v1275 = vadd.f32 %v1261, %v1274
    %v1276 = vpop.f32.mrf.mxu0
    %v1277 = vadd.f32 %v1263, %v1276
    %1278 = vdwg.mxu0
    %1279 = vmatpush.bf16.msra.mxu0 %v1052
    %1280 = vmatpush.bf16.msra.mxu0 %v1044
    %1281 = vmatpush.bf16.msra.mxu0 %v1036
    %1282 = vmatpush.bf16.msra.mxu0 %v1028
    %1283 = vmatpush.bf16.msra.mxu0 %v1020
    %1284 = vmatpush.bf16.msra.mxu0 %v1012
    %1285 = vmatpush.bf16.msra.mxu0 %v1004
    %1286 = vmatpush.bf16.msra.mxu0 %v996
    %1287 = vmatmul.bf16.gmra.mxu0 %v463
    %v1288 = vpop.f32.mrf.mxu0
    %v1289 = vadd.f32 %v596, %v1288
    %v1290 = vpop.f32.mrf.mxu0
    %v1291 = vadd.f32 %v596, %v1290
    %1292 = vdwg.mxu0
    %1293 = vmatpush.bf16.msra.mxu0 %v1116
    %1294 = vmatpush.bf16.msra.mxu0 %v1108
    %1295 = vmatpush.bf16.msra.mxu0 %v1100
    %1296 = vmatpush.bf16.msra.mxu0 %v1092
    %1297 = vmatpush.bf16.msra.mxu0 %v1084
    %1298 = vmatpush.bf16.msra.mxu0 %v1076
    %1299 = vmatpush.bf16.msra.mxu0 %v1068
    %1300 = vmatpush.bf16.msra.mxu0 %v1060
    %1301 = vmatmul.bf16.gmra.mxu0 %v464
    %v1302 = vpop.f32.mrf.mxu0
    %v1303 = vadd.f32 %v1289, %v1302
    %v1304 = vpop.f32.mrf.mxu0
    %v1305 = vadd.f32 %v1291, %v1304
    %1306 = vdwg.mxu0
    %1307 = vmatpush.bf16.msra.mxu0 %v1053
    %1308 = vmatpush.bf16.msra.mxu0 %v1045
    %1309 = vmatpush.bf16.msra.mxu0 %v1037
    %1310 = vmatpush.bf16.msra.mxu0 %v1029
    %1311 = vmatpush.bf16.msra.mxu0 %v1021
    %1312 = vmatpush.bf16.msra.mxu0 %v1013
    %1313 = vmatpush.bf16.msra.mxu0 %v1005
    %1314 = vmatpush.bf16.msra.mxu0 %v997
    %1315 = vmatmul.bf16.gmra.mxu0 %v463
    %v1316 = vpop.f32.mrf.mxu0
    %v1317 = vadd.f32 %v597, %v1316
    %v1318 = vpop.f32.mrf.mxu0
    %v1319 = vadd.f32 %v597, %v1318
    %1320 = vdwg.mxu0
    %1321 = vmatpush.bf16.msra.mxu0 %v1117
    %1322 = vmatpush.bf16.msra.mxu0 %v1109
    %1323 = vmatpush.bf16.msra.mxu0 %v1101
    %1324 = vmatpush.bf16.msra.mxu0 %v1093
    %1325 = vmatpush.bf16.msra.mxu0 %v1085
    %1326 = vmatpush.bf16.msra.mxu0 %v1077
    %1327 = vmatpush.bf16.msra.mxu0 %v1069
    %1328 = vmatpush.bf16.msra.mxu0 %v1061
    %1329 = vmatmul.bf16.gmra.mxu0 %v464
    %v1330 = vpop.f32.mrf.mxu0
    %v1331 = vadd.f32 %v1317, %v1330
    %v1332 = vpop.f32.mrf.mxu0
    %v1333 = vadd.f32 %v1319, %v1332
    %1334 = vdwg.mxu0
    %1335 = vmatpush.bf16.msra.mxu0 %v1054
    %1336 = vmatpush.bf16.msra.mxu0 %v1046
    %1337 = vmatpush.bf16.msra.mxu0 %v1038
    %1338 = vmatpush.bf16.msra.mxu0 %v1030
    %1339 = vmatpush.bf16.msra.mxu0 %v1022
    %1340 = vmatpush.bf16.msra.mxu0 %v1014
    %1341 = vmatpush.bf16.msra.mxu0 %v1006
    %1342 = vmatpush.bf16.msra.mxu0 %v998
    %1343 = vmatmul.bf16.gmra.mxu0 %v463
    %v1344 = vpop.f32.mrf.mxu0
    %v1345 = vadd.f32 %v598, %v1344
    %v1346 = vpop.f32.mrf.mxu0
    %v1347 = vadd.f32 %v598, %v1346
    %1348 = vdwg.mxu0
    %1349 = vmatpush.bf16.msra.mxu0 %v1118
    %1350 = vmatpush.bf16.msra.mxu0 %v1110
    %1351 = vmatpush.bf16.msra.mxu0 %v1102
    %1352 = vmatpush.bf16.msra.mxu0 %v1094
    %1353 = vmatpush.bf16.msra.mxu0 %v1086
    %1354 = vmatpush.bf16.msra.mxu0 %v1078
    %1355 = vmatpush.bf16.msra.mxu0 %v1070
    %1356 = vmatpush.bf16.msra.mxu0 %v1062
    %1357 = vmatmul.bf16.gmra.mxu0 %v464
    %v1358 = vpop.f32.mrf.mxu0
    %v1359 = vadd.f32 %v1345, %v1358
    %v1360 = vpop.f32.mrf.mxu0
    %v1361 = vadd.f32 %v1347, %v1360
    %1362 = vdwg.mxu0
    %1363 = vmatpush.bf16.msra.mxu0 %v1055
    %1364 = vmatpush.bf16.msra.mxu0 %v1047
    %1365 = vmatpush.bf16.msra.mxu0 %v1039
    %1366 = vmatpush.bf16.msra.mxu0 %v1031
    %1367 = vmatpush.bf16.msra.mxu0 %v1023
    %1368 = vmatpush.bf16.msra.mxu0 %v1015
    %1369 = vmatpush.bf16.msra.mxu0 %v1007
    %1370 = vmatpush.bf16.msra.mxu0 %v999
    %1371 = vmatmul.bf16.gmra.mxu0 %v463
    %v1372 = vpop.f32.mrf.mxu0
    %v1373 = vadd.f32 %v599, %v1372
    %v1374 = vpop.f32.mrf.mxu0
    %v1375 = vadd.f32 %v599, %v1374
    %1376 = vdwg.mxu0
    %1377 = vmatpush.bf16.msra.mxu0 %v1119
    %1378 = vmatpush.bf16.msra.mxu0 %v1111
    %1379 = vmatpush.bf16.msra.mxu0 %v1103
    %1380 = vmatpush.bf16.msra.mxu0 %v1095
    %1381 = vmatpush.bf16.msra.mxu0 %v1087
    %1382 = vmatpush.bf16.msra.mxu0 %v1079
    %1383 = vmatpush.bf16.msra.mxu0 %v1071
    %1384 = vmatpush.bf16.msra.mxu0 %v1063
    %1385 = vmatmul.bf16.gmra.mxu0 %v464
    %v1386 = vpop.f32.mrf.mxu0
    %v1387 = vadd.f32 %v1373, %v1386
    %v1388 = vpop.f32.mrf.mxu0
    %v1389 = vadd.f32 %v1375, %v1388
    %1390 = vdwg.mxu0
    %1391 = vmatpush.bf16.msra.mxu0 %v1056
    %1392 = vmatpush.bf16.msra.mxu0 %v1048
    %1393 = vmatpush.bf16.msra.mxu0 %v1040
    %1394 = vmatpush.bf16.msra.mxu0 %v1032
    %1395 = vmatpush.bf16.msra.mxu0 %v1024
    %1396 = vmatpush.bf16.msra.mxu0 %v1016
    %1397 = vmatpush.bf16.msra.mxu0 %v1008
    %1398 = vmatpush.bf16.msra.mxu0 %v1000
    %1399 = vmatmul.bf16.gmra.mxu0 %v463
    %v1400 = vpop.f32.mrf.mxu0
    %v1401 = vadd.f32 %v600, %v1400
    %v1402 = vpop.f32.mrf.mxu0
    %v1403 = vadd.f32 %v600, %v1402
    %1404 = vdwg.mxu0
    %1405 = vmatpush.bf16.msra.mxu0 %v1120
    %1406 = vmatpush.bf16.msra.mxu0 %v1112
    %1407 = vmatpush.bf16.msra.mxu0 %v1104
    %1408 = vmatpush.bf16.msra.mxu0 %v1096
    %1409 = vmatpush.bf16.msra.mxu0 %v1088
    %1410 = vmatpush.bf16.msra.mxu0 %v1080
    %1411 = vmatpush.bf16.msra.mxu0 %v1072
    %1412 = vmatpush.bf16.msra.mxu0 %v1064
    %1413 = vmatmul.bf16.gmra.mxu0 %v464
    %v1414 = vpop.f32.mrf.mxu0
    %v1415 = vadd.f32 %v1401, %v1414
    %v1416 = vpop.f32.mrf.mxu0
    %v1417 = vadd.f32 %v1403, %v1416
    %1418 = vdwg.mxu0
    %1419 = vmatpush.bf16.msra.mxu0 %v1057
    %1420 = vmatpush.bf16.msra.mxu0 %v1049
    %1421 = vmatpush.bf16.msra.mxu0 %v1041
    %1422 = vmatpush.bf16.msra.mxu0 %v1033
    %1423 = vmatpush.bf16.msra.mxu0 %v1025
    %1424 = vmatpush.bf16.msra.mxu0 %v1017
    %1425 = vmatpush.bf16.msra.mxu0 %v1009
    %1426 = vmatpush.bf16.msra.mxu0 %v1001
    %1427 = vmatmul.bf16.gmra.mxu0 %v463
    %v1428 = vpop.f32.mrf.mxu0
    %v1429 = vadd.f32 %v601, %v1428
    %v1430 = vpop.f32.mrf.mxu0
    %v1431 = vadd.f32 %v601, %v1430
    %1432 = vdwg.mxu0
    %1433 = vmatpush.bf16.msra.mxu0 %v1121
    %1434 = vmatpush.bf16.msra.mxu0 %v1113
    %1435 = vmatpush.bf16.msra.mxu0 %v1105
    %1436 = vmatpush.bf16.msra.mxu0 %v1097
    %1437 = vmatpush.bf16.msra.mxu0 %v1089
    %1438 = vmatpush.bf16.msra.mxu0 %v1081
    %1439 = vmatpush.bf16.msra.mxu0 %v1073
    %1440 = vmatpush.bf16.msra.mxu0 %v1065
    %1441 = vmatmul.bf16.gmra.mxu0 %v464
    %v1442 = vpop.f32.mrf.mxu0
    %v1443 = vadd.f32 %v1429, %v1442
    %v1444 = vpop.f32.mrf.mxu0
    %v1445 = vadd.f32 %v1431, %v1444
    %1446 = vdwg.mxu0
    %1447 = vmatpush.bf16.msra.mxu0 %v1058
    %1448 = vmatpush.bf16.msra.mxu0 %v1050
    %1449 = vmatpush.bf16.msra.mxu0 %v1042
    %1450 = vmatpush.bf16.msra.mxu0 %v1034
    %1451 = vmatpush.bf16.msra.mxu0 %v1026
    %1452 = vmatpush.bf16.msra.mxu0 %v1018
    %1453 = vmatpush.bf16.msra.mxu0 %v1010
    %1454 = vmatpush.bf16.msra.mxu0 %v1002
    %1455 = vmatmul.bf16.gmra.mxu0 %v463
    %v1456 = vpop.f32.mrf.mxu0
    %v1457 = vadd.f32 %v602, %v1456
    %v1458 = vpop.f32.mrf.mxu0
    %v1459 = vadd.f32 %v602, %v1458
    %1460 = vdwg.mxu0
    %1461 = vmatpush.bf16.msra.mxu0 %v1122
    %1462 = vmatpush.bf16.msra.mxu0 %v1114
    %1463 = vmatpush.bf16.msra.mxu0 %v1106
    %1464 = vmatpush.bf16.msra.mxu0 %v1098
    %1465 = vmatpush.bf16.msra.mxu0 %v1090
    %1466 = vmatpush.bf16.msra.mxu0 %v1082
    %1467 = vmatpush.bf16.msra.mxu0 %v1074
    %1468 = vmatpush.bf16.msra.mxu0 %v1066
    %1469 = vmatmul.bf16.gmra.mxu0 %v464
    %v1470 = vpop.f32.mrf.mxu0
    %v1471 = vadd.f32 %v1457, %v1470
    %v1472 = vpop.f32.mrf.mxu0
    %v1473 = vadd.f32 %v1459, %v1472
    %1474 = vdwg.mxu0
    %v1475 = vxor.u32 %v1275, 2147483648
    %v1476 = vxor.u32 %v1303, 2147483648
    %v1477 = vxor.u32 %v1331, 2147483648
    %v1478 = vxor.u32 %v1359, 2147483648
    %v1479 = vxor.u32 %v1387, 2147483648
    %v1480 = vxor.u32 %v1415, 2147483648
    %v1481 = vxor.u32 %v1443, 2147483648
    %v1482 = vxor.u32 %v1471, 2147483648
    %v1483 = vxor.u32 %v1277, 2147483648
    %v1484 = vxor.u32 %v1305, 2147483648
    %v1485 = vxor.u32 %v1333, 2147483648
    %v1486 = vxor.u32 %v1361, 2147483648
    %v1487 = vxor.u32 %v1389, 2147483648
    %v1488 = vxor.u32 %v1417, 2147483648
    %v1489 = vxor.u32 %v1445, 2147483648
    %v1490 = vxor.u32 %v1473, 2147483648
    %v1491 = vmul.f32 %v1475, 1.442695
    %v1492 = vpow.pop %v1491
    %v1493 = vmul.f32 %v1476, 1.442695
    %v1494 = vpow.pop %v1493
    %v1495 = vmul.f32 %v1477, 1.442695
    %v1496 = vpow.pop %v1495
    %v1497 = vmul.f32 %v1478, 1.442695
    %v1498 = vpow.pop %v1497
    %v1499 = vmul.f32 %v1479, 1.442695
    %v1500 = vpow.pop %v1499
    %v1501 = vmul.f32 %v1480, 1.442695
    %v1502 = vpow.pop %v1501
    %v1503 = vmul.f32 %v1481, 1.442695
    %v1504 = vpow.pop %v1503
    %v1505 = vmul.f32 %v1482, 1.442695
    %v1506 = vpow.pop %v1505
    %v1507 = vmul.f32 %v1483, 1.442695
    %v1508 = vpow.pop %v1507
    %v1509 = vmul.f32 %v1484, 1.442695
    %v1510 = vpow.pop %v1509
    %v1511 = vmul.f32 %v1485, 1.442695
    %v1512 = vpow.pop %v1511
    %v1513 = vmul.f32 %v1486, 1.442695
    %v1514 = vpow.pop %v1513
    %v1515 = vmul.f32 %v1487, 1.442695
    %v1516 = vpow.pop %v1515
    %v1517 = vmul.f32 %v1488, 1.442695
    %v1518 = vpow.pop %v1517
    %v1519 = vmul.f32 %v1489, 1.442695
    %v1520 = vpow.pop %v1519
    %v1521 = vmul.f32 %v1490, 1.442695
    %v1522 = vpow.pop %v1521
    %v1523 = vadd.f32 %v1492, 1.0
    %v1524 = vadd.f32 %v1494, 1.0
    %v1525 = vadd.f32 %v1496, 1.0
    %v1526 = vadd.f32 %v1498, 1.0
    %v1527 = vadd.f32 %v1500, 1.0
    %v1528 = vadd.f32 %v1502, 1.0
    %v1529 = vadd.f32 %v1504, 1.0
    %v1530 = vadd.f32 %v1506, 1.0
    %v1531 = vadd.f32 %v1508, 1.0
    %v1532 = vadd.f32 %v1510, 1.0
    %v1533 = vadd.f32 %v1512, 1.0
    %v1534 = vadd.f32 %v1514, 1.0
    %v1535 = vadd.f32 %v1516, 1.0
    %v1536 = vadd.f32 %v1518, 1.0
    %v1537 = vadd.f32 %v1520, 1.0
    %v1538 = vadd.f32 %v1522, 1.0
    %v1539 = vrcp.pop %v1523
    %v1540 = vmul.f32 %v1523, %v1539
    %v1541 = vsub.f32 1.0, %v1540
    %v1542 = vmul.f32 %v1539, %v1541
    %v1543 = vadd.f32 %v1539, %v1542
    %vm1544 = vweird.f32 %v1523
    %vm1545 = vweird.f32 %v1539
    %vm1546 = vmor %vm1544, %vm1545
    %v1547 = vsel %vm1546, %v1539, %v1543
    %v1548 = vand.u32 2147483647, %v1523
    %vm1549 = vcmp.eq.f32.partialorder %v1548, 8.507059e+37
    %v1550 = vand.u32 %v1523, 2147483648
    %v1551 = vor.u32 1.1754944e-38, %v1550
    %v1552 = vsel %vm1549, %v1551, %v1547
    %v1553 = vmul.f32 1.0, %v1552
    %v1554 = vrcp.pop %v1524
    %v1555 = vmul.f32 %v1524, %v1554
    %v1556 = vsub.f32 1.0, %v1555
    %v1557 = vmul.f32 %v1554, %v1556
    %v1558 = vadd.f32 %v1554, %v1557
    %vm1559 = vweird.f32 %v1524
    %vm1560 = vweird.f32 %v1554
    %vm1561 = vmor %vm1559, %vm1560
    %v1562 = vsel %vm1561, %v1554, %v1558
    %v1563 = vand.u32 2147483647, %v1524
    %vm1564 = vcmp.eq.f32.partialorder %v1563, 8.507059e+37
    %v1565 = vand.u32 %v1524, 2147483648
    %v1566 = vor.u32 1.1754944e-38, %v1565
    %v1567 = vsel %vm1564, %v1566, %v1562
    %v1568 = vmul.f32 1.0, %v1567
    %v1569 = vrcp.pop %v1525
    %v1570 = vmul.f32 %v1525, %v1569
    %v1571 = vsub.f32 1.0, %v1570
    %v1572 = vmul.f32 %v1569, %v1571
    %v1573 = vadd.f32 %v1569, %v1572
    %vm1574 = vweird.f32 %v1525
    %vm1575 = vweird.f32 %v1569
    %vm1576 = vmor %vm1574, %vm1575
    %v1577 = vsel %vm1576, %v1569, %v1573
    %v1578 = vand.u32 2147483647, %v1525
    %vm1579 = vcmp.eq.f32.partialorder %v1578, 8.507059e+37
    %v1580 = vand.u32 %v1525, 2147483648
    %v1581 = vor.u32 1.1754944e-38, %v1580
    %v1582 = vsel %vm1579, %v1581, %v1577
    %v1583 = vmul.f32 1.0, %v1582
    %v1584 = vrcp.pop %v1526
    %v1585 = vmul.f32 %v1526, %v1584
    %v1586 = vsub.f32 1.0, %v1585
    %v1587 = vmul.f32 %v1584, %v1586
    %v1588 = vadd.f32 %v1584, %v1587
    %vm1589 = vweird.f32 %v1526
    %vm1590 = vweird.f32 %v1584
    %vm1591 = vmor %vm1589, %vm1590
    %v1592 = vsel %vm1591, %v1584, %v1588
    %v1593 = vand.u32 2147483647, %v1526
    %vm1594 = vcmp.eq.f32.partialorder %v1593, 8.507059e+37
    %v1595 = vand.u32 %v1526, 2147483648
    %v1596 = vor.u32 1.1754944e-38, %v1595
    %v1597 = vsel %vm1594, %v1596, %v1592
    %v1598 = vmul.f32 1.0, %v1597
    %v1599 = vrcp.pop %v1527
    %v1600 = vmul.f32 %v1527, %v1599
    %v1601 = vsub.f32 1.0, %v1600
    %v1602 = vmul.f32 %v1599, %v1601
    %v1603 = vadd.f32 %v1599, %v1602
    %vm1604 = vweird.f32 %v1527
    %vm1605 = vweird.f32 %v1599
    %vm1606 = vmor %vm1604, %vm1605
    %v1607 = vsel %vm1606, %v1599, %v1603
    %v1608 = vand.u32 2147483647, %v1527
    %vm1609 = vcmp.eq.f32.partialorder %v1608, 8.507059e+37
    %v1610 = vand.u32 %v1527, 2147483648
    %v1611 = vor.u32 1.1754944e-38, %v1610
    %v1612 = vsel %vm1609, %v1611, %v1607
    %v1613 = vmul.f32 1.0, %v1612
    %v1614 = vrcp.pop %v1528
    %v1615 = vmul.f32 %v1528, %v1614
    %v1616 = vsub.f32 1.0, %v1615
    %v1617 = vmul.f32 %v1614, %v1616
    %v1618 = vadd.f32 %v1614, %v1617
    %vm1619 = vweird.f32 %v1528
    %vm1620 = vweird.f32 %v1614
    %vm1621 = vmor %vm1619, %vm1620
    %v1622 = vsel %vm1621, %v1614, %v1618
    %v1623 = vand.u32 2147483647, %v1528
    %vm1624 = vcmp.eq.f32.partialorder %v1623, 8.507059e+37
    %v1625 = vand.u32 %v1528, 2147483648
    %v1626 = vor.u32 1.1754944e-38, %v1625
    %v1627 = vsel %vm1624, %v1626, %v1622
    %v1628 = vmul.f32 1.0, %v1627
    %v1629 = vrcp.pop %v1529
    %v1630 = vmul.f32 %v1529, %v1629
    %v1631 = vsub.f32 1.0, %v1630
    %v1632 = vmul.f32 %v1629, %v1631
    %v1633 = vadd.f32 %v1629, %v1632
    %vm1634 = vweird.f32 %v1529
    %vm1635 = vweird.f32 %v1629
    %vm1636 = vmor %vm1634, %vm1635
    %v1637 = vsel %vm1636, %v1629, %v1633
    %v1638 = vand.u32 2147483647, %v1529
    %vm1639 = vcmp.eq.f32.partialorder %v1638, 8.507059e+37
    %v1640 = vand.u32 %v1529, 2147483648
    %v1641 = vor.u32 1.1754944e-38, %v1640
    %v1642 = vsel %vm1639, %v1641, %v1637
    %v1643 = vmul.f32 1.0, %v1642
    %v1644 = vrcp.pop %v1530
    %v1645 = vmul.f32 %v1530, %v1644
    %v1646 = vsub.f32 1.0, %v1645
    %v1647 = vmul.f32 %v1644, %v1646
    %v1648 = vadd.f32 %v1644, %v1647
    %vm1649 = vweird.f32 %v1530
    %vm1650 = vweird.f32 %v1644
    %vm1651 = vmor %vm1649, %vm1650
    %v1652 = vsel %vm1651, %v1644, %v1648
    %v1653 = vand.u32 2147483647, %v1530
    %vm1654 = vcmp.eq.f32.partialorder %v1653, 8.507059e+37
    %v1655 = vand.u32 %v1530, 2147483648
    %v1656 = vor.u32 1.1754944e-38, %v1655
    %v1657 = vsel %vm1654, %v1656, %v1652
    %v1658 = vmul.f32 1.0, %v1657
    %v1659 = vrcp.pop %v1531
    %v1660 = vmul.f32 %v1531, %v1659
    %v1661 = vsub.f32 1.0, %v1660
    %v1662 = vmul.f32 %v1659, %v1661
    %v1663 = vadd.f32 %v1659, %v1662
    %vm1664 = vweird.f32 %v1531
    %vm1665 = vweird.f32 %v1659
    %vm1666 = vmor %vm1664, %vm1665
    %v1667 = vsel %vm1666, %v1659, %v1663
    %v1668 = vand.u32 2147483647, %v1531
    %vm1669 = vcmp.eq.f32.partialorder %v1668, 8.507059e+37
    %v1670 = vand.u32 %v1531, 2147483648
    %v1671 = vor.u32 1.1754944e-38, %v1670
    %v1672 = vsel %vm1669, %v1671, %v1667
    %v1673 = vmul.f32 1.0, %v1672
    %v1674 = vrcp.pop %v1532
    %v1675 = vmul.f32 %v1532, %v1674
    %v1676 = vsub.f32 1.0, %v1675
    %v1677 = vmul.f32 %v1674, %v1676
    %v1678 = vadd.f32 %v1674, %v1677
    %vm1679 = vweird.f32 %v1532
    %vm1680 = vweird.f32 %v1674
    %vm1681 = vmor %vm1679, %vm1680
    %v1682 = vsel %vm1681, %v1674, %v1678
    %v1683 = vand.u32 2147483647, %v1532
    %vm1684 = vcmp.eq.f32.partialorder %v1683, 8.507059e+37
    %v1685 = vand.u32 %v1532, 2147483648
    %v1686 = vor.u32 1.1754944e-38, %v1685
    %v1687 = vsel %vm1684, %v1686, %v1682
    %v1688 = vmul.f32 1.0, %v1687
    %v1689 = vrcp.pop %v1533
    %v1690 = vmul.f32 %v1533, %v1689
    %v1691 = vsub.f32 1.0, %v1690
    %v1692 = vmul.f32 %v1689, %v1691
    %v1693 = vadd.f32 %v1689, %v1692
    %vm1694 = vweird.f32 %v1533
    %vm1695 = vweird.f32 %v1689
    %vm1696 = vmor %vm1694, %vm1695
    %v1697 = vsel %vm1696, %v1689, %v1693
    %v1698 = vand.u32 2147483647, %v1533
    %vm1699 = vcmp.eq.f32.partialorder %v1698, 8.507059e+37
    %v1700 = vand.u32 %v1533, 2147483648
    %v1701 = vor.u32 1.1754944e-38, %v1700
    %v1702 = vsel %vm1699, %v1701, %v1697
    %v1703 = vmul.f32 1.0, %v1702
    %v1704 = vrcp.pop %v1534
    %v1705 = vmul.f32 %v1534, %v1704
    %v1706 = vsub.f32 1.0, %v1705
    %v1707 = vmul.f32 %v1704, %v1706
    %v1708 = vadd.f32 %v1704, %v1707
    %vm1709 = vweird.f32 %v1534
    %vm1710 = vweird.f32 %v1704
    %vm1711 = vmor %vm1709, %vm1710
    %v1712 = vsel %vm1711, %v1704, %v1708
    %v1713 = vand.u32 2147483647, %v1534
    %vm1714 = vcmp.eq.f32.partialorder %v1713, 8.507059e+37
    %v1715 = vand.u32 %v1534, 2147483648
    %v1716 = vor.u32 1.1754944e-38, %v1715
    %v1717 = vsel %vm1714, %v1716, %v1712
    %v1718 = vmul.f32 1.0, %v1717
    %v1719 = vrcp.pop %v1535
    %v1720 = vmul.f32 %v1535, %v1719
    %v1721 = vsub.f32 1.0, %v1720
    %v1722 = vmul.f32 %v1719, %v1721
    %v1723 = vadd.f32 %v1719, %v1722
    %vm1724 = vweird.f32 %v1535
    %vm1725 = vweird.f32 %v1719
    %vm1726 = vmor %vm1724, %vm1725
    %v1727 = vsel %vm1726, %v1719, %v1723
    %v1728 = vand.u32 2147483647, %v1535
    %vm1729 = vcmp.eq.f32.partialorder %v1728, 8.507059e+37
    %v1730 = vand.u32 %v1535, 2147483648
    %v1731 = vor.u32 1.1754944e-38, %v1730
    %v1732 = vsel %vm1729, %v1731, %v1727
    %v1733 = vmul.f32 1.0, %v1732
    %v1734 = vrcp.pop %v1536
    %v1735 = vmul.f32 %v1536, %v1734
    %v1736 = vsub.f32 1.0, %v1735
    %v1737 = vmul.f32 %v1734, %v1736
    %v1738 = vadd.f32 %v1734, %v1737
    %vm1739 = vweird.f32 %v1536
    %vm1740 = vweird.f32 %v1734
    %vm1741 = vmor %vm1739, %vm1740
    %v1742 = vsel %vm1741, %v1734, %v1738
    %v1743 = vand.u32 2147483647, %v1536
    %vm1744 = vcmp.eq.f32.partialorder %v1743, 8.507059e+37
    %v1745 = vand.u32 %v1536, 2147483648
    %v1746 = vor.u32 1.1754944e-38, %v1745
    %v1747 = vsel %vm1744, %v1746, %v1742
    %v1748 = vmul.f32 1.0, %v1747
    %v1749 = vrcp.pop %v1537
    %v1750 = vmul.f32 %v1537, %v1749
    %v1751 = vsub.f32 1.0, %v1750
    %v1752 = vmul.f32 %v1749, %v1751
    %v1753 = vadd.f32 %v1749, %v1752
    %vm1754 = vweird.f32 %v1537
    %vm1755 = vweird.f32 %v1749
    %vm1756 = vmor %vm1754, %vm1755
    %v1757 = vsel %vm1756, %v1749, %v1753
    %v1758 = vand.u32 2147483647, %v1537
    %vm1759 = vcmp.eq.f32.partialorder %v1758, 8.507059e+37
    %v1760 = vand.u32 %v1537, 2147483648
    %v1761 = vor.u32 1.1754944e-38, %v1760
    %v1762 = vsel %vm1759, %v1761, %v1757
    %v1763 = vmul.f32 1.0, %v1762
    %v1764 = vrcp.pop %v1538
    %v1765 = vmul.f32 %v1538, %v1764
    %v1766 = vsub.f32 1.0, %v1765
    %v1767 = vmul.f32 %v1764, %v1766
    %v1768 = vadd.f32 %v1764, %v1767
    %vm1769 = vweird.f32 %v1538
    %vm1770 = vweird.f32 %v1764
    %vm1771 = vmor %vm1769, %vm1770
    %v1772 = vsel %vm1771, %v1764, %v1768
    %v1773 = vand.u32 2147483647, %v1538
    %vm1774 = vcmp.eq.f32.partialorder %v1773, 8.507059e+37
    %v1775 = vand.u32 %v1538, 2147483648
    %v1776 = vor.u32 1.1754944e-38, %v1775
    %v1777 = vsel %vm1774, %v1776, %v1772
    %v1778 = vmul.f32 1.0, %v1777
    %v1779 = vmul.f32 %v1275, %v1553
    %v1780 = vmul.f32 %v1303, %v1568
    %v1781 = vmul.f32 %v1331, %v1583
    %v1782 = vmul.f32 %v1359, %v1598
    %v1783 = vmul.f32 %v1387, %v1613
    %v1784 = vmul.f32 %v1415, %v1628
    %v1785 = vmul.f32 %v1443, %v1643
    %v1786 = vmul.f32 %v1471, %v1658
    %v1787 = vmul.f32 %v1277, %v1673
    %v1788 = vmul.f32 %v1305, %v1688
    %v1789 = vmul.f32 %v1333, %v1703
    %v1790 = vmul.f32 %v1361, %v1718
    %v1791 = vmul.f32 %v1389, %v1733
    %v1792 = vmul.f32 %v1417, %v1748
    %v1793 = vmul.f32 %v1445, %v1763
    %v1794 = vmul.f32 %v1473, %v1778
    %v1795 = vpack.c.bf16 %v1787, %v1779
    %v1796 = vpack.c.bf16 %v1788, %v1780
    %v1797 = vpack.c.bf16 %v1789, %v1781
    %v1798 = vpack.c.bf16 %v1790, %v1782
    %v1799 = vpack.c.bf16 %v1791, %v1783
    %v1800 = vpack.c.bf16 %v1792, %v1784
    %v1801 = vpack.c.bf16 %v1793, %v1785
    %v1802 = vpack.c.bf16 %v1794, %v1786
    %v1803 = vld [vmem:[#allocation11] sm:$0xff]
    %v1804 = vld [vmem:[#allocation11 + $0x8] sm:$0xff]
    %v1805 = vld [vmem:[#allocation11 + $0x10] sm:$0xff]
    %v1806 = vld [vmem:[#allocation11 + $0x18] sm:$0xff]
    %v1807 = vld [vmem:[#allocation11 + $0x20] sm:$0xff]
    %v1808 = vld [vmem:[#allocation11 + $0x28] sm:$0xff]
    %v1809 = vld [vmem:[#allocation11 + $0x30] sm:$0xff]
    %v1810 = vld [vmem:[#allocation11 + $0x38] sm:$0xff]
    %v1811 = vld [vmem:[#allocation11 + $0x40] sm:$0xff]
    %v1812 = vld [vmem:[#allocation11 + $0x48] sm:$0xff]
    %v1813 = vld [vmem:[#allocation11 + $0x50] sm:$0xff]
    %v1814 = vld [vmem:[#allocation11 + $0x58] sm:$0xff]
    %v1815 = vld [vmem:[#allocation11 + $0x60] sm:$0xff]
    %v1816 = vld [vmem:[#allocation11 + $0x68] sm:$0xff]
    %v1817 = vld [vmem:[#allocation11 + $0x70] sm:$0xff]
    %v1818 = vld [vmem:[#allocation11 + $0x78] sm:$0xff]
    %v1819 = vld [vmem:[#allocation11 + $0x80] sm:$0xff]
    %v1820 = vld [vmem:[#allocation11 + $0x88] sm:$0xff]
    %v1821 = vld [vmem:[#allocation11 + $0x90] sm:$0xff]
    %v1822 = vld [vmem:[#allocation11 + $0x98] sm:$0xff]
    %v1823 = vld [vmem:[#allocation11 + $0xa0] sm:$0xff]
    %v1824 = vld [vmem:[#allocation11 + $0xa8] sm:$0xff]
    %v1825 = vld [vmem:[#allocation11 + $0xb0] sm:$0xff]
    %v1826 = vld [vmem:[#allocation11 + $0xb8] sm:$0xff]
    %v1827 = vld [vmem:[#allocation11 + $0xc0] sm:$0xff]
    %v1828 = vld [vmem:[#allocation11 + $0xc8] sm:$0xff]
    %v1829 = vld [vmem:[#allocation11 + $0xd0] sm:$0xff]
    %v1830 = vld [vmem:[#allocation11 + $0xd8] sm:$0xff]
    %v1831 = vld [vmem:[#allocation11 + $0xe0] sm:$0xff]
    %v1832 = vld [vmem:[#allocation11 + $0xe8] sm:$0xff]
    %v1833 = vld [vmem:[#allocation11 + $0xf0] sm:$0xff]
    %v1834 = vld [vmem:[#allocation11 + $0xf8] sm:$0xff]
    %v1835 = vld [vmem:[#allocation11 + $0x100] sm:$0xff]
    %v1836 = vld [vmem:[#allocation11 + $0x108] sm:$0xff]
    %v1837 = vld [vmem:[#allocation11 + $0x110] sm:$0xff]
    %v1838 = vld [vmem:[#allocation11 + $0x118] sm:$0xff]
    %v1839 = vld [vmem:[#allocation11 + $0x120] sm:$0xff]
    %v1840 = vld [vmem:[#allocation11 + $0x128] sm:$0xff]
    %v1841 = vld [vmem:[#allocation11 + $0x130] sm:$0xff]
    %v1842 = vld [vmem:[#allocation11 + $0x138] sm:$0xff]
    %v1843 = vld [vmem:[#allocation11 + $0x140] sm:$0xff]
    %v1844 = vld [vmem:[#allocation11 + $0x148] sm:$0xff]
    %v1845 = vld [vmem:[#allocation11 + $0x150] sm:$0xff]
    %v1846 = vld [vmem:[#allocation11 + $0x158] sm:$0xff]
    %v1847 = vld [vmem:[#allocation11 + $0x160] sm:$0xff]
    %v1848 = vld [vmem:[#allocation11 + $0x168] sm:$0xff]
    %v1849 = vld [vmem:[#allocation11 + $0x170] sm:$0xff]
    %v1850 = vld [vmem:[#allocation11 + $0x178] sm:$0xff]
    %v1851 = vld [vmem:[#allocation11 + $0x180] sm:$0xff]
    %v1852 = vld [vmem:[#allocation11 + $0x188] sm:$0xff]
    %v1853 = vld [vmem:[#allocation11 + $0x190] sm:$0xff]
    %v1854 = vld [vmem:[#allocation11 + $0x198] sm:$0xff]
    %v1855 = vld [vmem:[#allocation11 + $0x1a0] sm:$0xff]
    %v1856 = vld [vmem:[#allocation11 + $0x1a8] sm:$0xff]
    %v1857 = vld [vmem:[#allocation11 + $0x1b0] sm:$0xff]
    %v1858 = vld [vmem:[#allocation11 + $0x1b8] sm:$0xff]
    %v1859 = vld [vmem:[#allocation11 + $0x1c0] sm:$0xff]
    %v1860 = vld [vmem:[#allocation11 + $0x1c8] sm:$0xff]
    %v1861 = vld [vmem:[#allocation11 + $0x1d0] sm:$0xff]
    %v1862 = vld [vmem:[#allocation11 + $0x1d8] sm:$0xff]
    %v1863 = vld [vmem:[#allocation11 + $0x1e0] sm:$0xff]
    %v1864 = vld [vmem:[#allocation11 + $0x1e8] sm:$0xff]
    %v1865 = vld [vmem:[#allocation11 + $0x1f0] sm:$0xff]
    %v1866 = vld [vmem:[#allocation11 + $0x1f8] sm:$0xff]
    %v1867 = vld [vmem:[#allocation11 + $0x200] sm:$0xff]
    %v1868 = vld [vmem:[#allocation11 + $0x208] sm:$0xff]
    %v1869 = vld [vmem:[#allocation11 + $0x210] sm:$0xff]
    %v1870 = vld [vmem:[#allocation11 + $0x218] sm:$0xff]
    %v1871 = vld [vmem:[#allocation11 + $0x220] sm:$0xff]
    %v1872 = vld [vmem:[#allocation11 + $0x228] sm:$0xff]
    %v1873 = vld [vmem:[#allocation11 + $0x230] sm:$0xff]
    %v1874 = vld [vmem:[#allocation11 + $0x238] sm:$0xff]
    %v1875 = vld [vmem:[#allocation11 + $0x240] sm:$0xff]
    %v1876 = vld [vmem:[#allocation11 + $0x248] sm:$0xff]
    %v1877 = vld [vmem:[#allocation11 + $0x250] sm:$0xff]
    %v1878 = vld [vmem:[#allocation11 + $0x258] sm:$0xff]
    %v1879 = vld [vmem:[#allocation11 + $0x260] sm:$0xff]
    %v1880 = vld [vmem:[#allocation11 + $0x268] sm:$0xff]
    %v1881 = vld [vmem:[#allocation11 + $0x270] sm:$0xff]
    %v1882 = vld [vmem:[#allocation11 + $0x278] sm:$0xff]
    %v1883 = vld [vmem:[#allocation11 + $0x280] sm:$0xff]
    %v1884 = vld [vmem:[#allocation11 + $0x288] sm:$0xff]
    %v1885 = vld [vmem:[#allocation11 + $0x290] sm:$0xff]
    %v1886 = vld [vmem:[#allocation11 + $0x298] sm:$0xff]
    %v1887 = vld [vmem:[#allocation11 + $0x2a0] sm:$0xff]
    %v1888 = vld [vmem:[#allocation11 + $0x2a8] sm:$0xff]
    %v1889 = vld [vmem:[#allocation11 + $0x2b0] sm:$0xff]
    %v1890 = vld [vmem:[#allocation11 + $0x2b8] sm:$0xff]
    %v1891 = vld [vmem:[#allocation11 + $0x2c0] sm:$0xff]
    %v1892 = vld [vmem:[#allocation11 + $0x2c8] sm:$0xff]
    %v1893 = vld [vmem:[#allocation11 + $0x2d0] sm:$0xff]
    %v1894 = vld [vmem:[#allocation11 + $0x2d8] sm:$0xff]
    %v1895 = vld [vmem:[#allocation11 + $0x2e0] sm:$0xff]
    %v1896 = vld [vmem:[#allocation11 + $0x2e8] sm:$0xff]
    %v1897 = vld [vmem:[#allocation11 + $0x2f0] sm:$0xff]
    %v1898 = vld [vmem:[#allocation11 + $0x2f8] sm:$0xff]
    %v1899 = vld [vmem:[#allocation11 + $0x300] sm:$0xff]
    %v1900 = vld [vmem:[#allocation11 + $0x308] sm:$0xff]
    %v1901 = vld [vmem:[#allocation11 + $0x310] sm:$0xff]
    %v1902 = vld [vmem:[#allocation11 + $0x318] sm:$0xff]
    %v1903 = vld [vmem:[#allocation11 + $0x320] sm:$0xff]
    %v1904 = vld [vmem:[#allocation11 + $0x328] sm:$0xff]
    %v1905 = vld [vmem:[#allocation11 + $0x330] sm:$0xff]
    %v1906 = vld [vmem:[#allocation11 + $0x338] sm:$0xff]
    %v1907 = vld [vmem:[#allocation11 + $0x340] sm:$0xff]
    %v1908 = vld [vmem:[#allocation11 + $0x348] sm:$0xff]
    %v1909 = vld [vmem:[#allocation11 + $0x350] sm:$0xff]
    %v1910 = vld [vmem:[#allocation11 + $0x358] sm:$0xff]
    %v1911 = vld [vmem:[#allocation11 + $0x360] sm:$0xff]
    %v1912 = vld [vmem:[#allocation11 + $0x368] sm:$0xff]
    %v1913 = vld [vmem:[#allocation11 + $0x370] sm:$0xff]
    %v1914 = vld [vmem:[#allocation11 + $0x378] sm:$0xff]
    %v1915 = vld [vmem:[#allocation11 + $0x380] sm:$0xff]
    %v1916 = vld [vmem:[#allocation11 + $0x388] sm:$0xff]
    %v1917 = vld [vmem:[#allocation11 + $0x390] sm:$0xff]
    %v1918 = vld [vmem:[#allocation11 + $0x398] sm:$0xff]
    %v1919 = vld [vmem:[#allocation11 + $0x3a0] sm:$0xff]
    %v1920 = vld [vmem:[#allocation11 + $0x3a8] sm:$0xff]
    %v1921 = vld [vmem:[#allocation11 + $0x3b0] sm:$0xff]
    %v1922 = vld [vmem:[#allocation11 + $0x3b8] sm:$0xff]
    %v1923 = vld [vmem:[#allocation11 + $0x3c0] sm:$0xff]
    %v1924 = vld [vmem:[#allocation11 + $0x3c8] sm:$0xff]
    %v1925 = vld [vmem:[#allocation11 + $0x3d0] sm:$0xff]
    %v1926 = vld [vmem:[#allocation11 + $0x3d8] sm:$0xff]
    %v1927 = vld [vmem:[#allocation11 + $0x3e0] sm:$0xff]
    %v1928 = vld [vmem:[#allocation11 + $0x3e8] sm:$0xff]
    %v1929 = vld [vmem:[#allocation11 + $0x3f0] sm:$0xff]
    %v1930 = vld [vmem:[#allocation11 + $0x3f8] sm:$0xff]
    %v1931 = vld [vmem:[%s6] sm:$0x3]
    %v1933 = vperm.slane %v1931, 0
    %v1934 = vperm.slane %v1931, 1
    %v2065 = vunpack.c.l.b16 %v1803
    %v2066 = vunpack.c.h.b16 %v1803
    %v2067 = vunpack.c.l.b16 %v1804
    %v2068 = vunpack.c.h.b16 %v1804
    %v2069 = vunpack.c.l.b16 %v1805
    %v2070 = vunpack.c.h.b16 %v1805
    %v2071 = vunpack.c.l.b16 %v1806
    %v2072 = vunpack.c.h.b16 %v1806
    %v2073 = vunpack.c.l.b16 %v1807
    %v2074 = vunpack.c.h.b16 %v1807
    %v2075 = vunpack.c.l.b16 %v1808
    %v2076 = vunpack.c.h.b16 %v1808
    %v2077 = vunpack.c.l.b16 %v1809
    %v2078 = vunpack.c.h.b16 %v1809
    %v2079 = vunpack.c.l.b16 %v1810
    %v2080 = vunpack.c.h.b16 %v1810
    %v2081 = vunpack.c.l.b16 %v1811
    %v2082 = vunpack.c.h.b16 %v1811
    %v2083 = vunpack.c.l.b16 %v1812
    %v2084 = vunpack.c.h.b16 %v1812
    %v2085 = vunpack.c.l.b16 %v1813
    %v2086 = vunpack.c.h.b16 %v1813
    %v2087 = vunpack.c.l.b16 %v1814
    %v2088 = vunpack.c.h.b16 %v1814
    %v2089 = vunpack.c.l.b16 %v1815
    %v2090 = vunpack.c.h.b16 %v1815
    %v2091 = vunpack.c.l.b16 %v1816
    %v2092 = vunpack.c.h.b16 %v1816
    %v2093 = vunpack.c.l.b16 %v1817
    %v2094 = vunpack.c.h.b16 %v1817
    %v2095 = vunpack.c.l.b16 %v1818
    %v2096 = vunpack.c.h.b16 %v1818
    %v2097 = vunpack.c.l.b16 %v1819
    %v2098 = vunpack.c.h.b16 %v1819
    %v2099 = vunpack.c.l.b16 %v1820
    %v2100 = vunpack.c.h.b16 %v1820
    %v2101 = vunpack.c.l.b16 %v1821
    %v2102 = vunpack.c.h.b16 %v1821
    %v2103 = vunpack.c.l.b16 %v1822
    %v2104 = vunpack.c.h.b16 %v1822
    %v2105 = vunpack.c.l.b16 %v1823
    %v2106 = vunpack.c.h.b16 %v1823
    %v2107 = vunpack.c.l.b16 %v1824
    %v2108 = vunpack.c.h.b16 %v1824
    %v2109 = vunpack.c.l.b16 %v1825
    %v2110 = vunpack.c.h.b16 %v1825
    %v2111 = vunpack.c.l.b16 %v1826
    %v2112 = vunpack.c.h.b16 %v1826
    %v2113 = vunpack.c.l.b16 %v1827
    %v2114 = vunpack.c.h.b16 %v1827
    %v2115 = vunpack.c.l.b16 %v1828
    %v2116 = vunpack.c.h.b16 %v1828
    %v2117 = vunpack.c.l.b16 %v1829
    %v2118 = vunpack.c.h.b16 %v1829
    %v2119 = vunpack.c.l.b16 %v1830
    %v2120 = vunpack.c.h.b16 %v1830
    %v2121 = vunpack.c.l.b16 %v1831
    %v2122 = vunpack.c.h.b16 %v1831
    %v2123 = vunpack.c.l.b16 %v1832
    %v2124 = vunpack.c.h.b16 %v1832
    %v2125 = vunpack.c.l.b16 %v1833
    %v2126 = vunpack.c.h.b16 %v1833
    %v2127 = vunpack.c.l.b16 %v1834
    %v2128 = vunpack.c.h.b16 %v1834
    %v2129 = vunpack.c.l.b16 %v1835
    %v2130 = vunpack.c.h.b16 %v1835
    %v2131 = vunpack.c.l.b16 %v1836
    %v2132 = vunpack.c.h.b16 %v1836
    %v2133 = vunpack.c.l.b16 %v1837
    %v2134 = vunpack.c.h.b16 %v1837
    %v2135 = vunpack.c.l.b16 %v1838
    %v2136 = vunpack.c.h.b16 %v1838
    %v2137 = vunpack.c.l.b16 %v1839
    %v2138 = vunpack.c.h.b16 %v1839
    %v2139 = vunpack.c.l.b16 %v1840
    %v2140 = vunpack.c.h.b16 %v1840
    %v2141 = vunpack.c.l.b16 %v1841
    %v2142 = vunpack.c.h.b16 %v1841
    %v2143 = vunpack.c.l.b16 %v1842
    %v2144 = vunpack.c.h.b16 %v1842
    %v2145 = vunpack.c.l.b16 %v1843
    %v2146 = vunpack.c.h.b16 %v1843
    %v2147 = vunpack.c.l.b16 %v1844
    %v2148 = vunpack.c.h.b16 %v1844
    %v2149 = vunpack.c.l.b16 %v1845
    %v2150 = vunpack.c.h.b16 %v1845
    %v2151 = vunpack.c.l.b16 %v1846
    %v2152 = vunpack.c.h.b16 %v1846
    %v2153 = vunpack.c.l.b16 %v1847
    %v2154 = vunpack.c.h.b16 %v1847
    %v2155 = vunpack.c.l.b16 %v1848
    %v2156 = vunpack.c.h.b16 %v1848
    %v2157 = vunpack.c.l.b16 %v1849
    %v2158 = vunpack.c.h.b16 %v1849
    %v2159 = vunpack.c.l.b16 %v1850
    %v2160 = vunpack.c.h.b16 %v1850
    %v2161 = vunpack.c.l.b16 %v1851
    %v2162 = vunpack.c.h.b16 %v1851
    %v2163 = vunpack.c.l.b16 %v1852
    %v2164 = vunpack.c.h.b16 %v1852
    %v2165 = vunpack.c.l.b16 %v1853
    %v2166 = vunpack.c.h.b16 %v1853
    %v2167 = vunpack.c.l.b16 %v1854
    %v2168 = vunpack.c.h.b16 %v1854
    %v2169 = vunpack.c.l.b16 %v1855
    %v2170 = vunpack.c.h.b16 %v1855
    %v2171 = vunpack.c.l.b16 %v1856
    %v2172 = vunpack.c.h.b16 %v1856
    %v2173 = vunpack.c.l.b16 %v1857
    %v2174 = vunpack.c.h.b16 %v1857
    %v2175 = vunpack.c.l.b16 %v1858
    %v2176 = vunpack.c.h.b16 %v1858
    %v2177 = vunpack.c.l.b16 %v1859
    %v2178 = vunpack.c.h.b16 %v1859
    %v2179 = vunpack.c.l.b16 %v1860
    %v2180 = vunpack.c.h.b16 %v1860
    %v2181 = vunpack.c.l.b16 %v1861
    %v2182 = vunpack.c.h.b16 %v1861
    %v2183 = vunpack.c.l.b16 %v1862
    %v2184 = vunpack.c.h.b16 %v1862
    %v2185 = vunpack.c.l.b16 %v1863
    %v2186 = vunpack.c.h.b16 %v1863
    %v2187 = vunpack.c.l.b16 %v1864
    %v2188 = vunpack.c.h.b16 %v1864
    %v2189 = vunpack.c.l.b16 %v1865
    %v2190 = vunpack.c.h.b16 %v1865
    %v2191 = vunpack.c.l.b16 %v1866
    %v2192 = vunpack.c.h.b16 %v1866
    %v2193 = vunpack.c.l.b16 %v1867
    %v2194 = vunpack.c.h.b16 %v1867
    %v2195 = vunpack.c.l.b16 %v1868
    %v2196 = vunpack.c.h.b16 %v1868
    %v2197 = vunpack.c.l.b16 %v1869
    %v2198 = vunpack.c.h.b16 %v1869
    %v2199 = vunpack.c.l.b16 %v1870
    %v2200 = vunpack.c.h.b16 %v1870
    %v2201 = vunpack.c.l.b16 %v1871
    %v2202 = vunpack.c.h.b16 %v1871
    %v2203 = vunpack.c.l.b16 %v1872
    %v2204 = vunpack.c.h.b16 %v1872
    %v2205 = vunpack.c.l.b16 %v1873
    %v2206 = vunpack.c.h.b16 %v1873
    %v2207 = vunpack.c.l.b16 %v1874
    %v2208 = vunpack.c.h.b16 %v1874
    %v2209 = vunpack.c.l.b16 %v1875
    %v2210 = vunpack.c.h.b16 %v1875
    %v2211 = vunpack.c.l.b16 %v1876
    %v2212 = vunpack.c.h.b16 %v1876
    %v2213 = vunpack.c.l.b16 %v1877
    %v2214 = vunpack.c.h.b16 %v1877
    %v2215 = vunpack.c.l.b16 %v1878
    %v2216 = vunpack.c.h.b16 %v1878
    %v2217 = vunpack.c.l.b16 %v1879
    %v2218 = vunpack.c.h.b16 %v1879
    %v2219 = vunpack.c.l.b16 %v1880
    %v2220 = vunpack.c.h.b16 %v1880
    %v2221 = vunpack.c.l.b16 %v1881
    %v2222 = vunpack.c.h.b16 %v1881
    %v2223 = vunpack.c.l.b16 %v1882
    %v2224 = vunpack.c.h.b16 %v1882
    %v2225 = vunpack.c.l.b16 %v1883
    %v2226 = vunpack.c.h.b16 %v1883
    %v2227 = vunpack.c.l.b16 %v1884
    %v2228 = vunpack.c.h.b16 %v1884
    %v2229 = vunpack.c.l.b16 %v1885
    %v2230 = vunpack.c.h.b16 %v1885
    %v2231 = vunpack.c.l.b16 %v1886
    %v2232 = vunpack.c.h.b16 %v1886
    %v2233 = vunpack.c.l.b16 %v1887
    %v2234 = vunpack.c.h.b16 %v1887
    %v2235 = vunpack.c.l.b16 %v1888
    %v2236 = vunpack.c.h.b16 %v1888
    %v2237 = vunpack.c.l.b16 %v1889
    %v2238 = vunpack.c.h.b16 %v1889
    %v2239 = vunpack.c.l.b16 %v1890
    %v2240 = vunpack.c.h.b16 %v1890
    %v2241 = vunpack.c.l.b16 %v1891
    %v2242 = vunpack.c.h.b16 %v1891
    %v2243 = vunpack.c.l.b16 %v1892
    %v2244 = vunpack.c.h.b16 %v1892
    %v2245 = vunpack.c.l.b16 %v1893
    %v2246 = vunpack.c.h.b16 %v1893
    %v2247 = vunpack.c.l.b16 %v1894
    %v2248 = vunpack.c.h.b16 %v1894
    %v2249 = vunpack.c.l.b16 %v1895
    %v2250 = vunpack.c.h.b16 %v1895
    %v2251 = vunpack.c.l.b16 %v1896
    %v2252 = vunpack.c.h.b16 %v1896
    %v2253 = vunpack.c.l.b16 %v1897
    %v2254 = vunpack.c.h.b16 %v1897
    %v2255 = vunpack.c.l.b16 %v1898
    %v2256 = vunpack.c.h.b16 %v1898
    %v2257 = vunpack.c.l.b16 %v1899
    %v2258 = vunpack.c.h.b16 %v1899
    %v2259 = vunpack.c.l.b16 %v1900
    %v2260 = vunpack.c.h.b16 %v1900
    %v2261 = vunpack.c.l.b16 %v1901
    %v2262 = vunpack.c.h.b16 %v1901
    %v2263 = vunpack.c.l.b16 %v1902
    %v2264 = vunpack.c.h.b16 %v1902
    %v2265 = vunpack.c.l.b16 %v1903
    %v2266 = vunpack.c.h.b16 %v1903
    %v2267 = vunpack.c.l.b16 %v1904
    %v2268 = vunpack.c.h.b16 %v1904
    %v2269 = vunpack.c.l.b16 %v1905
    %v2270 = vunpack.c.h.b16 %v1905
    %v2271 = vunpack.c.l.b16 %v1906
    %v2272 = vunpack.c.h.b16 %v1906
    %v2273 = vunpack.c.l.b16 %v1907
    %v2274 = vunpack.c.h.b16 %v1907
    %v2275 = vunpack.c.l.b16 %v1908
    %v2276 = vunpack.c.h.b16 %v1908
    %v2277 = vunpack.c.l.b16 %v1909
    %v2278 = vunpack.c.h.b16 %v1909
    %v2279 = vunpack.c.l.b16 %v1910
    %v2280 = vunpack.c.h.b16 %v1910
    %v2281 = vunpack.c.l.b16 %v1911
    %v2282 = vunpack.c.h.b16 %v1911
    %v2283 = vunpack.c.l.b16 %v1912
    %v2284 = vunpack.c.h.b16 %v1912
    %v2285 = vunpack.c.l.b16 %v1913
    %v2286 = vunpack.c.h.b16 %v1913
    %v2287 = vunpack.c.l.b16 %v1914
    %v2288 = vunpack.c.h.b16 %v1914
    %v2289 = vunpack.c.l.b16 %v1915
    %v2290 = vunpack.c.h.b16 %v1915
    %v2291 = vunpack.c.l.b16 %v1916
    %v2292 = vunpack.c.h.b16 %v1916
    %v2293 = vunpack.c.l.b16 %v1917
    %v2294 = vunpack.c.h.b16 %v1917
    %v2295 = vunpack.c.l.b16 %v1918
    %v2296 = vunpack.c.h.b16 %v1918
    %v2297 = vunpack.c.l.b16 %v1919
    %v2298 = vunpack.c.h.b16 %v1919
    %v2299 = vunpack.c.l.b16 %v1920
    %v2300 = vunpack.c.h.b16 %v1920
    %v2301 = vunpack.c.l.b16 %v1921
    %v2302 = vunpack.c.h.b16 %v1921
    %v2303 = vunpack.c.l.b16 %v1922
    %v2304 = vunpack.c.h.b16 %v1922
    %v2305 = vunpack.c.l.b16 %v1923
    %v2306 = vunpack.c.h.b16 %v1923
    %v2307 = vunpack.c.l.b16 %v1924
    %v2308 = vunpack.c.h.b16 %v1924
    %v2309 = vunpack.c.l.b16 %v1925
    %v2310 = vunpack.c.h.b16 %v1925
    %v2311 = vunpack.c.l.b16 %v1926
    %v2312 = vunpack.c.h.b16 %v1926
    %v2313 = vunpack.c.l.b16 %v1927
    %v2314 = vunpack.c.h.b16 %v1927
    %v2315 = vunpack.c.l.b16 %v1928
    %v2316 = vunpack.c.h.b16 %v1928
    %v2317 = vunpack.c.l.b16 %v1929
    %v2318 = vunpack.c.h.b16 %v1929
    %v2319 = vunpack.c.l.b16 %v1930
    %v2320 = vunpack.c.h.b16 %v1930
    %v2321 = vpack.c.b16 %v2067, %v2065
    %v2322 = vpack.c.b16 %v2068, %v2066
    %v2323 = vpack.c.b16 %v2071, %v2069
    %v2324 = vpack.c.b16 %v2072, %v2070
    %v2325 = vpack.c.b16 %v2075, %v2073
    %v2326 = vpack.c.b16 %v2076, %v2074
    %v2327 = vpack.c.b16 %v2079, %v2077
    %v2328 = vpack.c.b16 %v2080, %v2078
    %v2329 = vpack.c.b16 %v2083, %v2081
    %v2330 = vpack.c.b16 %v2084, %v2082
    %v2331 = vpack.c.b16 %v2087, %v2085
    %v2332 = vpack.c.b16 %v2088, %v2086
    %v2333 = vpack.c.b16 %v2091, %v2089
    %v2334 = vpack.c.b16 %v2092, %v2090
    %v2335 = vpack.c.b16 %v2095, %v2093
    %v2336 = vpack.c.b16 %v2096, %v2094
    %v2337 = vpack.c.b16 %v2099, %v2097
    %v2338 = vpack.c.b16 %v2100, %v2098
    %v2339 = vpack.c.b16 %v2103, %v2101
    %v2340 = vpack.c.b16 %v2104, %v2102
    %v2341 = vpack.c.b16 %v2107, %v2105
    %v2342 = vpack.c.b16 %v2108, %v2106
    %v2343 = vpack.c.b16 %v2111, %v2109
    %v2344 = vpack.c.b16 %v2112, %v2110
    %v2345 = vpack.c.b16 %v2115, %v2113
    %v2346 = vpack.c.b16 %v2116, %v2114
    %v2347 = vpack.c.b16 %v2119, %v2117
    %v2348 = vpack.c.b16 %v2120, %v2118
    %v2349 = vpack.c.b16 %v2123, %v2121
    %v2350 = vpack.c.b16 %v2124, %v2122
    %v2351 = vpack.c.b16 %v2127, %v2125
    %v2352 = vpack.c.b16 %v2128, %v2126
    %v2353 = vpack.c.b16 %v2131, %v2129
    %v2354 = vpack.c.b16 %v2132, %v2130
    %v2355 = vpack.c.b16 %v2135, %v2133
    %v2356 = vpack.c.b16 %v2136, %v2134
    %v2357 = vpack.c.b16 %v2139, %v2137
    %v2358 = vpack.c.b16 %v2140, %v2138
    %v2359 = vpack.c.b16 %v2143, %v2141
    %v2360 = vpack.c.b16 %v2144, %v2142
    %v2361 = vpack.c.b16 %v2147, %v2145
    %v2362 = vpack.c.b16 %v2148, %v2146
    %v2363 = vpack.c.b16 %v2151, %v2149
    %v2364 = vpack.c.b16 %v2152, %v2150
    %v2365 = vpack.c.b16 %v2155, %v2153
    %v2366 = vpack.c.b16 %v2156, %v2154
    %v2367 = vpack.c.b16 %v2159, %v2157
    %v2368 = vpack.c.b16 %v2160, %v2158
    %v2369 = vpack.c.b16 %v2163, %v2161
    %v2370 = vpack.c.b16 %v2164, %v2162
    %v2371 = vpack.c.b16 %v2167, %v2165
    %v2372 = vpack.c.b16 %v2168, %v2166
    %v2373 = vpack.c.b16 %v2171, %v2169
    %v2374 = vpack.c.b16 %v2172, %v2170
    %v2375 = vpack.c.b16 %v2175, %v2173
    %v2376 = vpack.c.b16 %v2176, %v2174
    %v2377 = vpack.c.b16 %v2179, %v2177
    %v2378 = vpack.c.b16 %v2180, %v2178
    %v2379 = vpack.c.b16 %v2183, %v2181
    %v2380 = vpack.c.b16 %v2184, %v2182
    %v2381 = vpack.c.b16 %v2187, %v2185
    %v2382 = vpack.c.b16 %v2188, %v2186
    %v2383 = vpack.c.b16 %v2191, %v2189
    %v2384 = vpack.c.b16 %v2192, %v2190
    %v2385 = vpack.c.b16 %v2195, %v2193
    %v2386 = vpack.c.b16 %v2196, %v2194
    %v2387 = vpack.c.b16 %v2199, %v2197
    %v2388 = vpack.c.b16 %v2200, %v2198
    %v2389 = vpack.c.b16 %v2203, %v2201
    %v2390 = vpack.c.b16 %v2204, %v2202
    %v2391 = vpack.c.b16 %v2207, %v2205
    %v2392 = vpack.c.b16 %v2208, %v2206
    %v2393 = vpack.c.b16 %v2211, %v2209
    %v2394 = vpack.c.b16 %v2212, %v2210
    %v2395 = vpack.c.b16 %v2215, %v2213
    %v2396 = vpack.c.b16 %v2216, %v2214
    %v2397 = vpack.c.b16 %v2219, %v2217
    %v2398 = vpack.c.b16 %v2220, %v2218
    %v2399 = vpack.c.b16 %v2223, %v2221
    %v2400 = vpack.c.b16 %v2224, %v2222
    %v2401 = vpack.c.b16 %v2227, %v2225
    %v2402 = vpack.c.b16 %v2228, %v2226
    %v2403 = vpack.c.b16 %v2231, %v2229
    %v2404 = vpack.c.b16 %v2232, %v2230
    %v2405 = vpack.c.b16 %v2235, %v2233
    %v2406 = vpack.c.b16 %v2236, %v2234
    %v2407 = vpack.c.b16 %v2239, %v2237
    %v2408 = vpack.c.b16 %v2240, %v2238
    %v2409 = vpack.c.b16 %v2243, %v2241
    %v2410 = vpack.c.b16 %v2244, %v2242
    %v2411 = vpack.c.b16 %v2247, %v2245
    %v2412 = vpack.c.b16 %v2248, %v2246
    %v2413 = vpack.c.b16 %v2251, %v2249
    %v2414 = vpack.c.b16 %v2252, %v2250
    %v2415 = vpack.c.b16 %v2255, %v2253
    %v2416 = vpack.c.b16 %v2256, %v2254
    %v2417 = vpack.c.b16 %v2259, %v2257
    %v2418 = vpack.c.b16 %v2260, %v2258
    %v2419 = vpack.c.b16 %v2263, %v2261
    %v2420 = vpack.c.b16 %v2264, %v2262
    %v2421 = vpack.c.b16 %v2267, %v2265
    %v2422 = vpack.c.b16 %v2268, %v2266
    %v2423 = vpack.c.b16 %v2271, %v2269
    %v2424 = vpack.c.b16 %v2272, %v2270
    %v2425 = vpack.c.b16 %v2275, %v2273
    %v2426 = vpack.c.b16 %v2276, %v2274
    %v2427 = vpack.c.b16 %v2279, %v2277
    %v2428 = vpack.c.b16 %v2280, %v2278
    %v2429 = vpack.c.b16 %v2283, %v2281
    %v2430 = vpack.c.b16 %v2284, %v2282
    %v2431 = vpack.c.b16 %v2287, %v2285
    %v2432 = vpack.c.b16 %v2288, %v2286
    %v2433 = vpack.c.b16 %v2291, %v2289
    %v2434 = vpack.c.b16 %v2292, %v2290
    %v2435 = vpack.c.b16 %v2295, %v2293
    %v2436 = vpack.c.b16 %v2296, %v2294
    %v2437 = vpack.c.b16 %v2299, %v2297
    %v2438 = vpack.c.b16 %v2300, %v2298
    %v2439 = vpack.c.b16 %v2303, %v2301
    %v2440 = vpack.c.b16 %v2304, %v2302
    %v2441 = vpack.c.b16 %v2307, %v2305
    %v2442 = vpack.c.b16 %v2308, %v2306
    %v2443 = vpack.c.b16 %v2311, %v2309
    %v2444 = vpack.c.b16 %v2312, %v2310
    %v2445 = vpack.c.b16 %v2315, %v2313
    %v2446 = vpack.c.b16 %v2316, %v2314
    %v2447 = vpack.c.b16 %v2319, %v2317
    %v2448 = vpack.c.b16 %v2320, %v2318
    %2577 = vmatpush.bf16.msra.mxu0 %v2335
    %2578 = vmatpush.bf16.msra.mxu0 %v2333
    %2579 = vmatpush.bf16.msra.mxu0 %v2331
    %2580 = vmatpush.bf16.msra.mxu0 %v2329
    %2581 = vmatpush.bf16.msra.mxu0 %v2327
    %2582 = vmatpush.bf16.msra.mxu0 %v2325
    %2583 = vmatpush.bf16.msra.mxu0 %v2323
    %2584 = vmatpush.bf16.msra.mxu0 %v2321
    %2585 = vmatmul.bf16.gmra.mxu0 %v1795
    %v2586 = vpop.f32.mrf.mxu0
    %v2587 = vadd.f32 %v1933, %v2586
    %v2588 = vpop.f32.mrf.mxu0
    %v2589 = vadd.f32 %v1933, %v2588
    %2590 = vdwg.mxu0
    %2591 = vmatpush.bf16.msra.mxu0 %v2351
    %2592 = vmatpush.bf16.msra.mxu0 %v2349
    %2593 = vmatpush.bf16.msra.mxu0 %v2347
    %2594 = vmatpush.bf16.msra.mxu0 %v2345
    %2595 = vmatpush.bf16.msra.mxu0 %v2343
    %2596 = vmatpush.bf16.msra.mxu0 %v2341
    %2597 = vmatpush.bf16.msra.mxu0 %v2339
    %2598 = vmatpush.bf16.msra.mxu0 %v2337
    %2599 = vmatmul.bf16.gmra.mxu0 %v1796
    %v2600 = vpop.f32.mrf.mxu0
    %v2601 = vadd.f32 %v2587, %v2600
    %v2602 = vpop.f32.mrf.mxu0
    %v2603 = vadd.f32 %v2589, %v2602
    %2604 = vdwg.mxu0
    %2605 = vmatpush.bf16.msra.mxu0 %v2367
    %2606 = vmatpush.bf16.msra.mxu0 %v2365
    %2607 = vmatpush.bf16.msra.mxu0 %v2363
    %2608 = vmatpush.bf16.msra.mxu0 %v2361
    %2609 = vmatpush.bf16.msra.mxu0 %v2359
    %2610 = vmatpush.bf16.msra.mxu0 %v2357
    %2611 = vmatpush.bf16.msra.mxu0 %v2355
    %2612 = vmatpush.bf16.msra.mxu0 %v2353
    %2613 = vmatmul.bf16.gmra.mxu0 %v1797
    %v2614 = vpop.f32.mrf.mxu0
    %v2615 = vadd.f32 %v2601, %v2614
    %v2616 = vpop.f32.mrf.mxu0
    %v2617 = vadd.f32 %v2603, %v2616
    %2618 = vdwg.mxu0
    %2619 = vmatpush.bf16.msra.mxu0 %v2383
    %2620 = vmatpush.bf16.msra.mxu0 %v2381
    %2621 = vmatpush.bf16.msra.mxu0 %v2379
    %2622 = vmatpush.bf16.msra.mxu0 %v2377
    %2623 = vmatpush.bf16.msra.mxu0 %v2375
    %2624 = vmatpush.bf16.msra.mxu0 %v2373
    %2625 = vmatpush.bf16.msra.mxu0 %v2371
    %2626 = vmatpush.bf16.msra.mxu0 %v2369
    %2627 = vmatmul.bf16.gmra.mxu0 %v1798
    %v2628 = vpop.f32.mrf.mxu0
    %v2629 = vadd.f32 %v2615, %v2628
    %v2630 = vpop.f32.mrf.mxu0
    %v2631 = vadd.f32 %v2617, %v2630
    %2632 = vdwg.mxu0
    %2633 = vmatpush.bf16.msra.mxu0 %v2399
    %2634 = vmatpush.bf16.msra.mxu0 %v2397
    %2635 = vmatpush.bf16.msra.mxu0 %v2395
    %2636 = vmatpush.bf16.msra.mxu0 %v2393
    %2637 = vmatpush.bf16.msra.mxu0 %v2391
    %2638 = vmatpush.bf16.msra.mxu0 %v2389
    %2639 = vmatpush.bf16.msra.mxu0 %v2387
    %2640 = vmatpush.bf16.msra.mxu0 %v2385
    %2641 = vmatmul.bf16.gmra.mxu0 %v1799
    %v2642 = vpop.f32.mrf.mxu0
    %v2643 = vadd.f32 %v2629, %v2642
    %v2644 = vpop.f32.mrf.mxu0
    %v2645 = vadd.f32 %v2631, %v2644
    %2646 = vdwg.mxu0
    %2647 = vmatpush.bf16.msra.mxu0 %v2415
    %2648 = vmatpush.bf16.msra.mxu0 %v2413
    %2649 = vmatpush.bf16.msra.mxu0 %v2411
    %2650 = vmatpush.bf16.msra.mxu0 %v2409
    %2651 = vmatpush.bf16.msra.mxu0 %v2407
    %2652 = vmatpush.bf16.msra.mxu0 %v2405
    %2653 = vmatpush.bf16.msra.mxu0 %v2403
    %2654 = vmatpush.bf16.msra.mxu0 %v2401
    %2655 = vmatmul.bf16.gmra.mxu0 %v1800
    %v2656 = vpop.f32.mrf.mxu0
    %v2657 = vadd.f32 %v2643, %v2656
    %v2658 = vpop.f32.mrf.mxu0
    %v2659 = vadd.f32 %v2645, %v2658
    %2660 = vdwg.mxu0
    %2661 = vmatpush.bf16.msra.mxu0 %v2431
    %2662 = vmatpush.bf16.msra.mxu0 %v2429
    %2663 = vmatpush.bf16.msra.mxu0 %v2427
    %2664 = vmatpush.bf16.msra.mxu0 %v2425
    %2665 = vmatpush.bf16.msra.mxu0 %v2423
    %2666 = vmatpush.bf16.msra.mxu0 %v2421
    %2667 = vmatpush.bf16.msra.mxu0 %v2419
    %2668 = vmatpush.bf16.msra.mxu0 %v2417
    %2669 = vmatmul.bf16.gmra.mxu0 %v1801
    %v2670 = vpop.f32.mrf.mxu0
    %v2671 = vadd.f32 %v2657, %v2670
    %v2672 = vpop.f32.mrf.mxu0
    %v2673 = vadd.f32 %v2659, %v2672
    %2674 = vdwg.mxu0
    %2675 = vmatpush.bf16.msra.mxu0 %v2447
    %2676 = vmatpush.bf16.msra.mxu0 %v2445
    %2677 = vmatpush.bf16.msra.mxu0 %v2443
    %2678 = vmatpush.bf16.msra.mxu0 %v2441
    %2679 = vmatpush.bf16.msra.mxu0 %v2439
    %2680 = vmatpush.bf16.msra.mxu0 %v2437
    %2681 = vmatpush.bf16.msra.mxu0 %v2435
    %2682 = vmatpush.bf16.msra.mxu0 %v2433
    %2683 = vmatmul.bf16.gmra.mxu0 %v1802
    %v2684 = vpop.f32.mrf.mxu0
    %v2685 = vadd.f32 %v2671, %v2684
    %v2686 = vpop.f32.mrf.mxu0
    %v2687 = vadd.f32 %v2673, %v2686
    %2688 = vdwg.mxu0
    %2689 = vmatpush.bf16.msra.mxu0 %v2336
    %2690 = vmatpush.bf16.msra.mxu0 %v2334
    %2691 = vmatpush.bf16.msra.mxu0 %v2332
    %2692 = vmatpush.bf16.msra.mxu0 %v2330
    %2693 = vmatpush.bf16.msra.mxu0 %v2328
    %2694 = vmatpush.bf16.msra.mxu0 %v2326
    %2695 = vmatpush.bf16.msra.mxu0 %v2324
    %2696 = vmatpush.bf16.msra.mxu0 %v2322
    %2697 = vmatmul.bf16.gmra.mxu0 %v1795
    %v2698 = vpop.f32.mrf.mxu0
    %v2699 = vadd.f32 %v1934, %v2698
    %v2700 = vpop.f32.mrf.mxu0
    %v2701 = vadd.f32 %v1934, %v2700
    %2702 = vdwg.mxu0
    %2703 = vmatpush.bf16.msra.mxu0 %v2352
    %2704 = vmatpush.bf16.msra.mxu0 %v2350
    %2705 = vmatpush.bf16.msra.mxu0 %v2348
    %2706 = vmatpush.bf16.msra.mxu0 %v2346
    %2707 = vmatpush.bf16.msra.mxu0 %v2344
    %2708 = vmatpush.bf16.msra.mxu0 %v2342
    %2709 = vmatpush.bf16.msra.mxu0 %v2340
    %2710 = vmatpush.bf16.msra.mxu0 %v2338
    %2711 = vmatmul.bf16.gmra.mxu0 %v1796
    %v2712 = vpop.f32.mrf.mxu0
    %v2713 = vadd.f32 %v2699, %v2712
    %v2714 = vpop.f32.mrf.mxu0
    %v2715 = vadd.f32 %v2701, %v2714
    %2716 = vdwg.mxu0
    %2717 = vmatpush.bf16.msra.mxu0 %v2368
    %2718 = vmatpush.bf16.msra.mxu0 %v2366
    %2719 = vmatpush.bf16.msra.mxu0 %v2364
    %2720 = vmatpush.bf16.msra.mxu0 %v2362
    %2721 = vmatpush.bf16.msra.mxu0 %v2360
    %2722 = vmatpush.bf16.msra.mxu0 %v2358
    %2723 = vmatpush.bf16.msra.mxu0 %v2356
    %2724 = vmatpush.bf16.msra.mxu0 %v2354
    %2725 = vmatmul.bf16.gmra.mxu0 %v1797
    %v2726 = vpop.f32.mrf.mxu0
    %v2727 = vadd.f32 %v2713, %v2726
    %v2728 = vpop.f32.mrf.mxu0
    %v2729 = vadd.f32 %v2715, %v2728
    %2730 = vdwg.mxu0
    %2731 = vmatpush.bf16.msra.mxu0 %v2384
    %2732 = vmatpush.bf16.msra.mxu0 %v2382
    %2733 = vmatpush.bf16.msra.mxu0 %v2380
    %2734 = vmatpush.bf16.msra.mxu0 %v2378
    %2735 = vmatpush.bf16.msra.mxu0 %v2376
    %2736 = vmatpush.bf16.msra.mxu0 %v2374
    %2737 = vmatpush.bf16.msra.mxu0 %v2372
    %2738 = vmatpush.bf16.msra.mxu0 %v2370
    %2739 = vmatmul.bf16.gmra.mxu0 %v1798
    %v2740 = vpop.f32.mrf.mxu0
    %v2741 = vadd.f32 %v2727, %v2740
    %v2742 = vpop.f32.mrf.mxu0
    %v2743 = vadd.f32 %v2729, %v2742
    %2744 = vdwg.mxu0
    %2745 = vmatpush.bf16.msra.mxu0 %v2400
    %2746 = vmatpush.bf16.msra.mxu0 %v2398
    %2747 = vmatpush.bf16.msra.mxu0 %v2396
    %2748 = vmatpush.bf16.msra.mxu0 %v2394
    %2749 = vmatpush.bf16.msra.mxu0 %v2392
    %2750 = vmatpush.bf16.msra.mxu0 %v2390
    %2751 = vmatpush.bf16.msra.mxu0 %v2388
    %2752 = vmatpush.bf16.msra.mxu0 %v2386
    %2753 = vmatmul.bf16.gmra.mxu0 %v1799
    %v2754 = vpop.f32.mrf.mxu0
    %v2755 = vadd.f32 %v2741, %v2754
    %v2756 = vpop.f32.mrf.mxu0
    %v2757 = vadd.f32 %v2743, %v2756
    %2758 = vdwg.mxu0
    %2759 = vmatpush.bf16.msra.mxu0 %v2416
    %2760 = vmatpush.bf16.msra.mxu0 %v2414
    %2761 = vmatpush.bf16.msra.mxu0 %v2412
    %2762 = vmatpush.bf16.msra.mxu0 %v2410
    %2763 = vmatpush.bf16.msra.mxu0 %v2408
    %2764 = vmatpush.bf16.msra.mxu0 %v2406
    %2765 = vmatpush.bf16.msra.mxu0 %v2404
    %2766 = vmatpush.bf16.msra.mxu0 %v2402
    %2767 = vmatmul.bf16.gmra.mxu0 %v1800
    %v2768 = vpop.f32.mrf.mxu0
    %v2769 = vadd.f32 %v2755, %v2768
    %v2770 = vpop.f32.mrf.mxu0
    %v2771 = vadd.f32 %v2757, %v2770
    %2772 = vdwg.mxu0
    %2773 = vmatpush.bf16.msra.mxu0 %v2432
    %2774 = vmatpush.bf16.msra.mxu0 %v2430
    %2775 = vmatpush.bf16.msra.mxu0 %v2428
    %2776 = vmatpush.bf16.msra.mxu0 %v2426
    %2777 = vmatpush.bf16.msra.mxu0 %v2424
    %2778 = vmatpush.bf16.msra.mxu0 %v2422
    %2779 = vmatpush.bf16.msra.mxu0 %v2420
    %2780 = vmatpush.bf16.msra.mxu0 %v2418
    %2781 = vmatmul.bf16.gmra.mxu0 %v1801
    %v2782 = vpop.f32.mrf.mxu0
    %v2783 = vadd.f32 %v2769, %v2782
    %v2784 = vpop.f32.mrf.mxu0
    %v2785 = vadd.f32 %v2771, %v2784
    %2786 = vdwg.mxu0
    %2787 = vmatpush.bf16.msra.mxu0 %v2448
    %2788 = vmatpush.bf16.msra.mxu0 %v2446
    %2789 = vmatpush.bf16.msra.mxu0 %v2444
    %2790 = vmatpush.bf16.msra.mxu0 %v2442
    %2791 = vmatpush.bf16.msra.mxu0 %v2440
    %2792 = vmatpush.bf16.msra.mxu0 %v2438
    %2793 = vmatpush.bf16.msra.mxu0 %v2436
    %2794 = vmatpush.bf16.msra.mxu0 %v2434
    %2795 = vmatmul.bf16.gmra.mxu0 %v1802
    %v2796 = vpop.f32.mrf.mxu0
    %v2797 = vadd.f32 %v2783, %v2796
    %v2798 = vpop.f32.mrf.mxu0
    %v2799 = vadd.f32 %v2785, %v2798
    %2800 = vdwg.mxu0
    %2801 = vst [vmem:[#allocation13] sm:$0xff] %v2685
    %2802 = vst [vmem:[#allocation13 + $0x8] sm:$0xff] %v2797
    %2803 = vst [vmem:[#allocation13 + $0x10] sm:$0xff] %v2687
    %2804 = vst [vmem:[#allocation13 + $0x18] sm:$0xff] %v2799
    // Predicated region
    $region54: #{tpu_custom_call.1} parent=1 // pred_check
      _
    $region55: #{tpu_custom_call.1} parent=1 // pred_check_branch
      %2806 = sbr.rel (0) target = $region57
    $region56: #{tpu_custom_call.1} parent=1 // pred_region
      %2808 = vsyncadd [#allocation4], 0
      %s2809 = sshll.u32 [#allocation13], 4
      %s2810 = int_to_ptr.vmem [resolvable:$true] %s2809
      %s2811 = sshll.u32 %s7, 4
      %s2812 = int_to_ptr.hbm [resolvable:$true] %s2811
      %2817 = dma.vmem_to_hbm [thread:$0]  %s2810, 512, %s2812, [#allocation4], 256, 256, 16
    $region57: #{tpu_custom_call.1} parent=1 // pred_fallthru
      _
    // Predicated region
    $region58: #{tpu_custom_call.1} parent=1 // pred_check
      _
    $region59: #{tpu_custom_call.1} parent=1 // pred_check_branch
      %2819 = sbr.rel (0) target = $region61
    $region60: #{tpu_custom_call.1} parent=1 // pred_region
      %2821 = dma.done [#allocation4], 512
    $region61: #{tpu_custom_call.1} parent=1 // pred_fallthru
      _
    %2822 = vsyncpa [#allocation3], 1
    %2823 = vsyncpa [#allocation6], 1
    %2824 = vsyncpa [#allocation9], 1
    %2825 = vsyncpa [#allocation12], 1
    %2826 = vsyncpa [#allocation4], 1

</llo_original>
